<compile_context>
chip_gen: v7x
topology: tpu7x:2x2x1
jax: 0.10.0
libtpu: 0.0.40
codegen_flags: <defaults>
</compile_context>

<pallas_src>
import functools

import jax
import jax.numpy as jnp
from jax.experimental import pallas as pl
from jax.experimental.pallas import tpu as pltpu


def _gru_linear_kernel(T, b, x_ref, wih_ref, whh_emb_ref, bias_ref, out_ref):
    """GRU recurrence + Linear embedding, everything resident in VMEM.

    Shapes (L = 128 lanes per gate tile, b = padded batch = 8):
      x_ref:       (T*b, nIn)  bf16
      wih_ref:     (nIn, 3L)   bf16  gates [r|z|n], each in its own L-lane tile
      whh_emb_ref: (L, 4L)     bf16  lane tiles 0..2 = W_hh gates, tile 3 = W_emb
      bias_ref:    (8, 3L)     f32   row0=[b_r|b_z|b_in], row1=[b_hn|0|0],
                                     row2=[b_emb|0|0]
      out_ref:     (T*b, L)    f32   lane-dense output (cols >= nOut are 0)
    """
    L = bias_ref.shape[1] // 3

    bias = bias_ref[...]
    gx_bias = bias[0:1, :]                                     # (1, 3L)
    # Hoisted broadcasts (JAX does not CSE broadcast_in_dim inside loops).
    b_hn = jnp.broadcast_to(bias[1:2, 0:L], (b, L))            # (b, L)
    b_emb = bias[2:3, 0:L]                                     # (1, L)

    # ---- Hoisted, fused input projection: ONE MXU op for all three gates.
    gx = jnp.dot(x_ref[...], wih_ref[...],
                 preferred_element_type=jnp.float32) + gx_bias  # (T*b, 3L) f32

    w_all = whh_emb_ref[...]                                    # (L, 4L) bf16
    whh = w_all[:, 0:3 * L]                                     # (L, 3L)
    wemb = w_all[:, 3 * L:4 * L]                                # (L, L)

    # ---- Serial GRU recurrence, fully unrolled over small static T.
    # Per step: one fused (b, L)@(L, 3L) MXU op + f32 VPU/EUP gate math.
    hs = []
    h = jnp.zeros((b, L), jnp.float32)                          # PyTorch h0 = 0
    for t in range(T):
        lo = t * b                                              # 8-sublane aligned
        gh = jnp.dot(h.astype(whh.dtype), whh,
                     preferred_element_type=jnp.float32)        # (b, 3L) f32
        gx_t = gx[lo:lo + b, :]
        r = jax.nn.sigmoid(gx_t[:, 0:L] + gh[:, 0:L])
        z = jax.nn.sigmoid(gx_t[:, L:2 * L] + gh[:, L:2 * L])
        n = jnp.tanh(gx_t[:, 2 * L:3 * L] + r * (gh[:, 2 * L:3 * L] + b_hn))
        h = (1.0 - z) * n + z * h
        hs.append(h)

    # ---- Embedding Linear, hs kept in registers (no VMEM round-trip).
    hs_all = jnp.concatenate(hs, axis=0)                        # (T*b, L) f32
    y = jnp.dot(hs_all.astype(wemb.dtype), wemb,
                preferred_element_type=jnp.float32) + b_emb     # (T*b, L) f32
    out_ref[...] = y.astype(out_ref.dtype)                      # lane-dense store


def bidirectional_lstm_l2(x, w_ih, w_hh, b_ih, b_hh, w_emb, b_emb):
    """x: (T, b, nIn) -> (T, b, nOut); GRU (gate order [r|z|n]) + Linear.

    Weights are PyTorch-layout but pre-transposed: w_ih (nIn, 3H), w_hh (H, 3H),
    b_ih/b_hh (1, 3H), w_emb (H, nOut), b_emb (1, nOut).
    """
    T, b, nIn = x.shape
    H = w_hh.shape[0]
    nOut = w_emb.shape[1]
    L = 128                      # one lane tile per gate
    B = 8                        # batch padded to a full sublane group
    assert H <= L and nOut <= L and b <= B

    f32, bf16 = jnp.float32, jnp.bfloat16

    # ---- Slab 1: input, batch padded to 8 sublanes, bf16 for the MXU.
    x_pad = jnp.zeros((T, B, nIn), f32).at[:, :b, :].set(x)
    x2 = x_pad.reshape(T * B, nIn).astype(bf16)                        # (T*B, nIn)

    def gate_cols(w, g):   # slice gate g out of fused [r|z|n] and pad H -> L lanes
        blk = w[:, g * H:(g + 1) * H]
        return jnp.pad(blk, ((0, 0), (0, L - H)))

    # ---- Slab 2: W_ih, per-gate 128-lane tiles.
    wih_slab = jnp.concatenate([gate_cols(w_ih, g) for g in range(3)],
                               axis=1).astype(bf16)                    # (nIn, 3L)

    # ---- Slab 3: W_hh gates (rows padded H->L) + W_emb, four 128-lane tiles.
    whh_rows = jnp.pad(w_hh, ((0, L - H), (0, 0)))                     # (L, 3H)
    whh_tiles = jnp.concatenate([gate_cols(whh_rows, g) for g in range(3)],
                                axis=1)                                # (L, 3L)
    wemb_tile = jnp.pad(w_emb, ((0, L - H), (0, L - nOut)))            # (L, L)
    whh_emb_slab = jnp.concatenate([whh_tiles, wemb_tile],
                                   axis=1).astype(bf16)                # (L, 4L)

    # ---- Slab 4: biases, one (8, 3L) f32 tile.
    def pad_lanes(v):
        return jnp.pad(v, ((0, 0), (0, L - v.shape[1])))

    row_gx = jnp.concatenate([pad_lanes(b_ih[:, :H] + b_hh[:, :H]),      # b_ir+b_hr
                              pad_lanes(b_ih[:, H:2 * H] + b_hh[:, H:2 * H]),
                              pad_lanes(b_ih[:, 2 * H:])], axis=1)       # b_in
    row_hn = jnp.concatenate([pad_lanes(b_hh[:, 2 * H:]),
                              jnp.zeros((1, 2 * L), f32)], axis=1)       # b_hn
    row_emb = jnp.concatenate([pad_lanes(b_emb),
                               jnp.zeros((1, 2 * L), f32)], axis=1)
    bias_slab = jnp.concatenate([row_gx, row_hn, row_emb,
                                 jnp.zeros((5, 3 * L), f32)], axis=0)    # (8, 3L)

    vmem = pl.BlockSpec(memory_space=pltpu.MemorySpace.VMEM)
    out2 = pl.pallas_call(
        functools.partial(_gru_linear_kernel, T, B),
        out_shape=jax.ShapeDtypeStruct((T * B, L), x.dtype),
        in_specs=[vmem] * 4,           # 4 packed operands, whole-array resident
        out_specs=vmem,                # lane-dense (T*B, 128) output store
    )(x2, wih_slab, whh_emb_slab, bias_slab)

    return out2.reshape(T, B, L)[:, :b, :nOut]


def reference_forward(x, w_ih, w_hh, b_ih, b_hh, w_emb, b_emb):
    """Plain-JAX f32 GRU + Linear reference (PyTorch semantics)."""
    T, b, nIn = x.shape
    H = w_hh.shape[0]

    def step(h, x_t):
        gx = x_t @ w_ih + b_ih
        gh = h @ w_hh + b_hh
        r = jax.nn.sigmoid(gx[:, :H] + gh[:, :H])
        z = jax.nn.sigmoid(gx[:, H:2 * H] + gh[:, H:2 * H])
        n = jnp.tanh(gx[:, 2 * H:] + r * gh[:, 2 * H:])
        h_new = (1.0 - z) * n + z * h
        return h_new, h_new

    h0 = jnp.zeros((b, H), x.dtype)
    _, hs = jax.lax.scan(step, h0, x)       # (T, b, H)
    return hs @ w_emb + b_emb               # (T, b, nOut)


if __name__ == "__main__":
    # Module config: nIn=16, nHidden=32, nOut=16 ; sequence T=8, batch b=2
    T, b, nIn, H, nOut = 8, 2, 16, 32, 16

    key = jax.random.PRNGKey(0)
    keys = jax.random.split(key, 8)
    k = 1.0 / jnp.sqrt(jnp.float32(H))   # PyTorch-style uniform(-1/sqrt(H), 1/sqrt(H))

    # GRU parameters (stored pre-transposed for (rows, in) @ (in, out) matmuls).
    w_ih = jax.random.uniform(keys[0], (nIn, 3 * H), jnp.float32, -k, k)
    w_hh = jax.random.uniform(keys[1], (H, 3 * H), jnp.float32, -k, k)
    b_ih = jax.random.uniform(keys[2], (1, 3 * H), jnp.float32, -k, k)
    b_hh = jax.random.uniform(keys[3], (1, 3 * H), jnp.float32, -k, k)
    # Linear "embedding" parameters.
    w_emb = jax.random.uniform(keys[4], (H, nOut), jnp.float32, -k, k)
    b_emb = jax.random.uniform(keys[5], (1, nOut), jnp.float32, -k, k)

    # Input: (T, b, nIn) seq-major, as nn.GRU (batch_first=False) expects.
    x = jax.random.normal(keys[6], (T, b, nIn), jnp.float32)

    out = bidirectional_lstm_l2(x, w_ih, w_hh, b_ih, b_hh, w_emb, b_emb)
    out = jax.block_until_ready(out)

    ref = reference_forward(x, w_ih, w_hh, b_ih, b_hh, w_emb, b_emb)
    assert out.shape == (T, b, nOut)
    # bf16 MXU operands (f32 accumulation / gate math) vs. the f32 reference:
    # loosened tolerance per review guidance.
    assert jnp.allclose(out, ref, atol=5e-2, rtol=5e-2), "Pallas output mismatch"

    print("KERNEL_OK")
</pallas_src>

<mosaic_0001>
module attributes {stable_mosaic.version = 11 : i64} {
  func.func @_gru_linear_kernel(%arg0: memref<64x16xbf16, #tpu.memory_space<vmem>>, %arg1: memref<16x384xbf16, #tpu.memory_space<vmem>>, %arg2: memref<128x512xbf16, #tpu.memory_space<vmem>>, %arg3: memref<8x384xf32, #tpu.memory_space<vmem>>, %arg4: memref<64x128xf32, #tpu.memory_space<vmem>>) attributes {dimension_semantics = [], scalar_prefetch = 0 : i64, scratch_operands = 0 : i64, tpu.core_type = #tpu.core_type<tc>} {
    %c0 = arith.constant 0 : index
    %c0_0 = arith.constant 0 : index
    %0 = vector.load %arg3[%c0, %c0_0] : memref<8x384xf32, #tpu.memory_space<vmem>>, vector<8x384xf32>
    %1 = vector.extract_strided_slice %0 {offsets = [0, 0], sizes = [1, 384], strides = [1, 1]} : vector<8x384xf32> to vector<1x384xf32>
    %2 = vector.extract_strided_slice %0 {offsets = [1, 0], sizes = [1, 128], strides = [1, 1]} : vector<8x384xf32> to vector<1x128xf32>
    %3 = vector.shape_cast %2 : vector<1x128xf32> to vector<1x128xf32>
    %4 = vector.broadcast %3 : vector<1x128xf32> to vector<8x128xf32>
    %5 = vector.extract_strided_slice %0 {offsets = [2, 0], sizes = [1, 128], strides = [1, 1]} : vector<8x384xf32> to vector<1x128xf32>
    %c0_1 = arith.constant 0 : index
    %c0_2 = arith.constant 0 : index
    %6 = vector.load %arg0[%c0_1, %c0_2] : memref<64x16xbf16, #tpu.memory_space<vmem>>, vector<64x16xbf16>
    %c0_3 = arith.constant 0 : index
    %c0_4 = arith.constant 0 : index
    %7 = vector.load %arg1[%c0_3, %c0_4] : memref<16x384xbf16, #tpu.memory_space<vmem>>, vector<16x384xbf16>
    %cst = arith.constant dense<0.000000e+00> : vector<64x384xf32>
    %8 = tpu.matmul %6, %7, %cst {dimension_numbers = #tpu.dot_dimension_numbers<[1], [0], [0], [1], [0, 0, 1, 1], [], []>} : vector<64x16xbf16>, vector<16x384xbf16>, vector<64x384xf32> -> vector<64x384xf32>
    %9 = vector.broadcast %1 : vector<1x384xf32> to vector<64x384xf32>
    %10 = arith.addf %8, %9 : vector<64x384xf32>
    %c0_5 = arith.constant 0 : index
    %c0_6 = arith.constant 0 : index
    %11 = vector.load %arg2[%c0_5, %c0_6] : memref<128x512xbf16, #tpu.memory_space<vmem>>, vector<128x512xbf16>
    %12 = vector.extract_strided_slice %11 {offsets = [0, 0], sizes = [128, 384], strides = [1, 1]} : vector<128x512xbf16> to vector<128x384xbf16>
    %13 = vector.extract_strided_slice %11 {offsets = [0, 384], sizes = [128, 128], strides = [1, 1]} : vector<128x512xbf16> to vector<128x128xbf16>
    %cst_7 = arith.constant 0.000000e+00 : f32
    %14 = vector.broadcast %cst_7 : f32 to vector<8x128xf32>
    %15 = arith.truncf %14 : vector<8x128xf32> to vector<8x128xbf16>
    %cst_8 = arith.constant dense<0.000000e+00> : vector<8x384xf32>
    %16 = tpu.matmul %15, %12, %cst_8 {dimension_numbers = #tpu.dot_dimension_numbers<[1], [0], [0], [1], [0, 0, 1, 1], [], []>} : vector<8x128xbf16>, vector<128x384xbf16>, vector<8x384xf32> -> vector<8x384xf32>
    %17 = vector.extract_strided_slice %10 {offsets = [0, 0], sizes = [8, 384], strides = [1, 1]} : vector<64x384xf32> to vector<8x384xf32>
    %18 = vector.extract_strided_slice %17 {offsets = [0, 0], sizes = [8, 128], strides = [1, 1]} : vector<8x384xf32> to vector<8x128xf32>
    %19 = vector.extract_strided_slice %16 {offsets = [0, 0], sizes = [8, 128], strides = [1, 1]} : vector<8x384xf32> to vector<8x128xf32>
    %20 = arith.addf %18, %19 : vector<8x128xf32>
    %21 = arith.negf %20 : vector<8x128xf32>
    %22 = math.exp %21 : vector<8x128xf32>
    %cst_9 = arith.constant 1.000000e+00 : f32
    %23 = vector.broadcast %cst_9 : f32 to vector<8x128xf32>
    %24 = arith.addf %23, %22 : vector<8x128xf32>
    %25 = arith.divf %23, %24 : vector<8x128xf32>
    %26 = vector.extract_strided_slice %17 {offsets = [0, 128], sizes = [8, 128], strides = [1, 1]} : vector<8x384xf32> to vector<8x128xf32>
    %27 = vector.extract_strided_slice %16 {offsets = [0, 128], sizes = [8, 128], strides = [1, 1]} : vector<8x384xf32> to vector<8x128xf32>
    %28 = arith.addf %26, %27 : vector<8x128xf32>
    %29 = arith.negf %28 : vector<8x128xf32>
    %30 = math.exp %29 : vector<8x128xf32>
    %cst_10 = arith.constant 1.000000e+00 : f32
    %31 = vector.broadcast %cst_10 : f32 to vector<8x128xf32>
    %32 = arith.addf %31, %30 : vector<8x128xf32>
    %33 = arith.divf %31, %32 : vector<8x128xf32>
    %34 = vector.extract_strided_slice %17 {offsets = [0, 256], sizes = [8, 128], strides = [1, 1]} : vector<8x384xf32> to vector<8x128xf32>
    %35 = vector.extract_strided_slice %16 {offsets = [0, 256], sizes = [8, 128], strides = [1, 1]} : vector<8x384xf32> to vector<8x128xf32>
    %36 = arith.addf %35, %4 : vector<8x128xf32>
    %37 = arith.mulf %25, %36 : vector<8x128xf32>
    %38 = arith.addf %34, %37 : vector<8x128xf32>
    %39 = math.tanh %38 : vector<8x128xf32>
    %cst_11 = arith.constant 1.000000e+00 : f32
    %40 = vector.broadcast %cst_11 : f32 to vector<8x128xf32>
    %41 = arith.subf %40, %33 : vector<8x128xf32>
    %42 = arith.mulf %41, %39 : vector<8x128xf32>
    %43 = arith.mulf %33, %14 : vector<8x128xf32>
    %44 = arith.addf %42, %43 : vector<8x128xf32>
    %45 = arith.truncf %44 : vector<8x128xf32> to vector<8x128xbf16>
    %cst_12 = arith.constant dense<0.000000e+00> : vector<8x384xf32>
    %46 = tpu.matmul %45, %12, %cst_12 {dimension_numbers = #tpu.dot_dimension_numbers<[1], [0], [0], [1], [0, 0, 1, 1], [], []>} : vector<8x128xbf16>, vector<128x384xbf16>, vector<8x384xf32> -> vector<8x384xf32>
    %47 = vector.extract_strided_slice %10 {offsets = [8, 0], sizes = [8, 384], strides = [1, 1]} : vector<64x384xf32> to vector<8x384xf32>
    %48 = vector.extract_strided_slice %47 {offsets = [0, 0], sizes = [8, 128], strides = [1, 1]} : vector<8x384xf32> to vector<8x128xf32>
    %49 = vector.extract_strided_slice %46 {offsets = [0, 0], sizes = [8, 128], strides = [1, 1]} : vector<8x384xf32> to vector<8x128xf32>
    %50 = arith.addf %48, %49 : vector<8x128xf32>
    %51 = arith.negf %50 : vector<8x128xf32>
    %52 = math.exp %51 : vector<8x128xf32>
    %cst_13 = arith.constant 1.000000e+00 : f32
    %53 = vector.broadcast %cst_13 : f32 to vector<8x128xf32>
    %54 = arith.addf %53, %52 : vector<8x128xf32>
    %55 = arith.divf %53, %54 : vector<8x128xf32>
    %56 = vector.extract_strided_slice %47 {offsets = [0, 128], sizes = [8, 128], strides = [1, 1]} : vector<8x384xf32> to vector<8x128xf32>
    %57 = vector.extract_strided_slice %46 {offsets = [0, 128], sizes = [8, 128], strides = [1, 1]} : vector<8x384xf32> to vector<8x128xf32>
    %58 = arith.addf %56, %57 : vector<8x128xf32>
    %59 = arith.negf %58 : vector<8x128xf32>
    %60 = math.exp %59 : vector<8x128xf32>
    %cst_14 = arith.constant 1.000000e+00 : f32
    %61 = vector.broadcast %cst_14 : f32 to vector<8x128xf32>
    %62 = arith.addf %61, %60 : vector<8x128xf32>
    %63 = arith.divf %61, %62 : vector<8x128xf32>
    %64 = vector.extract_strided_slice %47 {offsets = [0, 256], sizes = [8, 128], strides = [1, 1]} : vector<8x384xf32> to vector<8x128xf32>
    %65 = vector.extract_strided_slice %46 {offsets = [0, 256], sizes = [8, 128], strides = [1, 1]} : vector<8x384xf32> to vector<8x128xf32>
    %66 = arith.addf %65, %4 : vector<8x128xf32>
    %67 = arith.mulf %55, %66 : vector<8x128xf32>
    %68 = arith.addf %64, %67 : vector<8x128xf32>
    %69 = math.tanh %68 : vector<8x128xf32>
    %cst_15 = arith.constant 1.000000e+00 : f32
    %70 = vector.broadcast %cst_15 : f32 to vector<8x128xf32>
    %71 = arith.subf %70, %63 : vector<8x128xf32>
    %72 = arith.mulf %71, %69 : vector<8x128xf32>
    %73 = arith.mulf %63, %44 : vector<8x128xf32>
    %74 = arith.addf %72, %73 : vector<8x128xf32>
    %75 = arith.truncf %74 : vector<8x128xf32> to vector<8x128xbf16>
    %cst_16 = arith.constant dense<0.000000e+00> : vector<8x384xf32>
    %76 = tpu.matmul %75, %12, %cst_16 {dimension_numbers = #tpu.dot_dimension_numbers<[1], [0], [0], [1], [0, 0, 1, 1], [], []>} : vector<8x128xbf16>, vector<128x384xbf16>, vector<8x384xf32> -> vector<8x384xf32>
    %77 = vector.extract_strided_slice %10 {offsets = [16, 0], sizes = [8, 384], strides = [1, 1]} : vector<64x384xf32> to vector<8x384xf32>
    %78 = vector.extract_strided_slice %77 {offsets = [0, 0], sizes = [8, 128], strides = [1, 1]} : vector<8x384xf32> to vector<8x128xf32>
    %79 = vector.extract_strided_slice %76 {offsets = [0, 0], sizes = [8, 128], strides = [1, 1]} : vector<8x384xf32> to vector<8x128xf32>
    %80 = arith.addf %78, %79 : vector<8x128xf32>
    %81 = arith.negf %80 : vector<8x128xf32>
    %82 = math.exp %81 : vector<8x128xf32>
    %cst_17 = arith.constant 1.000000e+00 : f32
    %83 = vector.broadcast %cst_17 : f32 to vector<8x128xf32>
    %84 = arith.addf %83, %82 : vector<8x128xf32>
    %85 = arith.divf %83, %84 : vector<8x128xf32>
    %86 = vector.extract_strided_slice %77 {offsets = [0, 128], sizes = [8, 128], strides = [1, 1]} : vector<8x384xf32> to vector<8x128xf32>
    %87 = vector.extract_strided_slice %76 {offsets = [0, 128], sizes = [8, 128], strides = [1, 1]} : vector<8x384xf32> to vector<8x128xf32>
    %88 = arith.addf %86, %87 : vector<8x128xf32>
    %89 = arith.negf %88 : vector<8x128xf32>
    %90 = math.exp %89 : vector<8x128xf32>
    %cst_18 = arith.constant 1.000000e+00 : f32
    %91 = vector.broadcast %cst_18 : f32 to vector<8x128xf32>
    %92 = arith.addf %91, %90 : vector<8x128xf32>
    %93 = arith.divf %91, %92 : vector<8x128xf32>
    %94 = vector.extract_strided_slice %77 {offsets = [0, 256], sizes = [8, 128], strides = [1, 1]} : vector<8x384xf32> to vector<8x128xf32>
    %95 = vector.extract_strided_slice %76 {offsets = [0, 256], sizes = [8, 128], strides = [1, 1]} : vector<8x384xf32> to vector<8x128xf32>
    %96 = arith.addf %95, %4 : vector<8x128xf32>
    %97 = arith.mulf %85, %96 : vector<8x128xf32>
    %98 = arith.addf %94, %97 : vector<8x128xf32>
    %99 = math.tanh %98 : vector<8x128xf32>
    %cst_19 = arith.constant 1.000000e+00 : f32
    %100 = vector.broadcast %cst_19 : f32 to vector<8x128xf32>
    %101 = arith.subf %100, %93 : vector<8x128xf32>
    %102 = arith.mulf %101, %99 : vector<8x128xf32>
    %103 = arith.mulf %93, %74 : vector<8x128xf32>
    %104 = arith.addf %102, %103 : vector<8x128xf32>
    %105 = arith.truncf %104 : vector<8x128xf32> to vector<8x128xbf16>
    %cst_20 = arith.constant dense<0.000000e+00> : vector<8x384xf32>
    %106 = tpu.matmul %105, %12, %cst_20 {dimension_numbers = #tpu.dot_dimension_numbers<[1], [0], [0], [1], [0, 0, 1, 1], [], []>} : vector<8x128xbf16>, vector<128x384xbf16>, vector<8x384xf32> -> vector<8x384xf32>
    %107 = vector.extract_strided_slice %10 {offsets = [24, 0], sizes = [8, 384], strides = [1, 1]} : vector<64x384xf32> to vector<8x384xf32>
    %108 = vector.extract_strided_slice %107 {offsets = [0, 0], sizes = [8, 128], strides = [1, 1]} : vector<8x384xf32> to vector<8x128xf32>
    %109 = vector.extract_strided_slice %106 {offsets = [0, 0], sizes = [8, 128], strides = [1, 1]} : vector<8x384xf32> to vector<8x128xf32>
    %110 = arith.addf %108, %109 : vector<8x128xf32>
    %111 = arith.negf %110 : vector<8x128xf32>
    %112 = math.exp %111 : vector<8x128xf32>
    %cst_21 = arith.constant 1.000000e+00 : f32
    %113 = vector.broadcast %cst_21 : f32 to vector<8x128xf32>
    %114 = arith.addf %113, %112 : vector<8x128xf32>
    %115 = arith.divf %113, %114 : vector<8x128xf32>
    %116 = vector.extract_strided_slice %107 {offsets = [0, 128], sizes = [8, 128], strides = [1, 1]} : vector<8x384xf32> to vector<8x128xf32>
    %117 = vector.extract_strided_slice %106 {offsets = [0, 128], sizes = [8, 128], strides = [1, 1]} : vector<8x384xf32> to vector<8x128xf32>
    %118 = arith.addf %116, %117 : vector<8x128xf32>
    %119 = arith.negf %118 : vector<8x128xf32>
    %120 = math.exp %119 : vector<8x128xf32>
    %cst_22 = arith.constant 1.000000e+00 : f32
    %121 = vector.broadcast %cst_22 : f32 to vector<8x128xf32>
    %122 = arith.addf %121, %120 : vector<8x128xf32>
    %123 = arith.divf %121, %122 : vector<8x128xf32>
    %124 = vector.extract_strided_slice %107 {offsets = [0, 256], sizes = [8, 128], strides = [1, 1]} : vector<8x384xf32> to vector<8x128xf32>
    %125 = vector.extract_strided_slice %106 {offsets = [0, 256], sizes = [8, 128], strides = [1, 1]} : vector<8x384xf32> to vector<8x128xf32>
    %126 = arith.addf %125, %4 : vector<8x128xf32>
    %127 = arith.mulf %115, %126 : vector<8x128xf32>
    %128 = arith.addf %124, %127 : vector<8x128xf32>
    %129 = math.tanh %128 : vector<8x128xf32>
    %cst_23 = arith.constant 1.000000e+00 : f32
    %130 = vector.broadcast %cst_23 : f32 to vector<8x128xf32>
    %131 = arith.subf %130, %123 : vector<8x128xf32>
    %132 = arith.mulf %131, %129 : vector<8x128xf32>
    %133 = arith.mulf %123, %104 : vector<8x128xf32>
    %134 = arith.addf %132, %133 : vector<8x128xf32>
    %135 = arith.truncf %134 : vector<8x128xf32> to vector<8x128xbf16>
    %cst_24 = arith.constant dense<0.000000e+00> : vector<8x384xf32>
    %136 = tpu.matmul %135, %12, %cst_24 {dimension_numbers = #tpu.dot_dimension_numbers<[1], [0], [0], [1], [0, 0, 1, 1], [], []>} : vector<8x128xbf16>, vector<128x384xbf16>, vector<8x384xf32> -> vector<8x384xf32>
    %137 = vector.extract_strided_slice %10 {offsets = [32, 0], sizes = [8, 384], strides = [1, 1]} : vector<64x384xf32> to vector<8x384xf32>
    %138 = vector.extract_strided_slice %137 {offsets = [0, 0], sizes = [8, 128], strides = [1, 1]} : vector<8x384xf32> to vector<8x128xf32>
    %139 = vector.extract_strided_slice %136 {offsets = [0, 0], sizes = [8, 128], strides = [1, 1]} : vector<8x384xf32> to vector<8x128xf32>
    %140 = arith.addf %138, %139 : vector<8x128xf32>
    %141 = arith.negf %140 : vector<8x128xf32>
    %142 = math.exp %141 : vector<8x128xf32>
    %cst_25 = arith.constant 1.000000e+00 : f32
    %143 = vector.broadcast %cst_25 : f32 to vector<8x128xf32>
    %144 = arith.addf %143, %142 : vector<8x128xf32>
    %145 = arith.divf %143, %144 : vector<8x128xf32>
    %146 = vector.extract_strided_slice %137 {offsets = [0, 128], sizes = [8, 128], strides = [1, 1]} : vector<8x384xf32> to vector<8x128xf32>
    %147 = vector.extract_strided_slice %136 {offsets = [0, 128], sizes = [8, 128], strides = [1, 1]} : vector<8x384xf32> to vector<8x128xf32>
    %148 = arith.addf %146, %147 : vector<8x128xf32>
    %149 = arith.negf %148 : vector<8x128xf32>
    %150 = math.exp %149 : vector<8x128xf32>
    %cst_26 = arith.constant 1.000000e+00 : f32
    %151 = vector.broadcast %cst_26 : f32 to vector<8x128xf32>
    %152 = arith.addf %151, %150 : vector<8x128xf32>
    %153 = arith.divf %151, %152 : vector<8x128xf32>
    %154 = vector.extract_strided_slice %137 {offsets = [0, 256], sizes = [8, 128], strides = [1, 1]} : vector<8x384xf32> to vector<8x128xf32>
    %155 = vector.extract_strided_slice %136 {offsets = [0, 256], sizes = [8, 128], strides = [1, 1]} : vector<8x384xf32> to vector<8x128xf32>
    %156 = arith.addf %155, %4 : vector<8x128xf32>
    %157 = arith.mulf %145, %156 : vector<8x128xf32>
    %158 = arith.addf %154, %157 : vector<8x128xf32>
    %159 = math.tanh %158 : vector<8x128xf32>
    %cst_27 = arith.constant 1.000000e+00 : f32
    %160 = vector.broadcast %cst_27 : f32 to vector<8x128xf32>
    %161 = arith.subf %160, %153 : vector<8x128xf32>
    %162 = arith.mulf %161, %159 : vector<8x128xf32>
    %163 = arith.mulf %153, %134 : vector<8x128xf32>
    %164 = arith.addf %162, %163 : vector<8x128xf32>
    %165 = arith.truncf %164 : vector<8x128xf32> to vector<8x128xbf16>
    %cst_28 = arith.constant dense<0.000000e+00> : vector<8x384xf32>
    %166 = tpu.matmul %165, %12, %cst_28 {dimension_numbers = #tpu.dot_dimension_numbers<[1], [0], [0], [1], [0, 0, 1, 1], [], []>} : vector<8x128xbf16>, vector<128x384xbf16>, vector<8x384xf32> -> vector<8x384xf32>
    %167 = vector.extract_strided_slice %10 {offsets = [40, 0], sizes = [8, 384], strides = [1, 1]} : vector<64x384xf32> to vector<8x384xf32>
    %168 = vector.extract_strided_slice %167 {offsets = [0, 0], sizes = [8, 128], strides = [1, 1]} : vector<8x384xf32> to vector<8x128xf32>
    %169 = vector.extract_strided_slice %166 {offsets = [0, 0], sizes = [8, 128], strides = [1, 1]} : vector<8x384xf32> to vector<8x128xf32>
    %170 = arith.addf %168, %169 : vector<8x128xf32>
    %171 = arith.negf %170 : vector<8x128xf32>
    %172 = math.exp %171 : vector<8x128xf32>
    %cst_29 = arith.constant 1.000000e+00 : f32
    %173 = vector.broadcast %cst_29 : f32 to vector<8x128xf32>
    %174 = arith.addf %173, %172 : vector<8x128xf32>
    %175 = arith.divf %173, %174 : vector<8x128xf32>
    %176 = vector.extract_strided_slice %167 {offsets = [0, 128], sizes = [8, 128], strides = [1, 1]} : vector<8x384xf32> to vector<8x128xf32>
    %177 = vector.extract_strided_slice %166 {offsets = [0, 128], sizes = [8, 128], strides = [1, 1]} : vector<8x384xf32> to vector<8x128xf32>
    %178 = arith.addf %176, %177 : vector<8x128xf32>
    %179 = arith.negf %178 : vector<8x128xf32>
    %180 = math.exp %179 : vector<8x128xf32>
    %cst_30 = arith.constant 1.000000e+00 : f32
    %181 = vector.broadcast %cst_30 : f32 to vector<8x128xf32>
    %182 = arith.addf %181, %180 : vector<8x128xf32>
    %183 = arith.divf %181, %182 : vector<8x128xf32>
    %184 = vector.extract_strided_slice %167 {offsets = [0, 256], sizes = [8, 128], strides = [1, 1]} : vector<8x384xf32> to vector<8x128xf32>
    %185 = vector.extract_strided_slice %166 {offsets = [0, 256], sizes = [8, 128], strides = [1, 1]} : vector<8x384xf32> to vector<8x128xf32>
    %186 = arith.addf %185, %4 : vector<8x128xf32>
    %187 = arith.mulf %175, %186 : vector<8x128xf32>
    %188 = arith.addf %184, %187 : vector<8x128xf32>
    %189 = math.tanh %188 : vector<8x128xf32>
    %cst_31 = arith.constant 1.000000e+00 : f32
    %190 = vector.broadcast %cst_31 : f32 to vector<8x128xf32>
    %191 = arith.subf %190, %183 : vector<8x128xf32>
    %192 = arith.mulf %191, %189 : vector<8x128xf32>
    %193 = arith.mulf %183, %164 : vector<8x128xf32>
    %194 = arith.addf %192, %193 : vector<8x128xf32>
    %195 = arith.truncf %194 : vector<8x128xf32> to vector<8x128xbf16>
    %cst_32 = arith.constant dense<0.000000e+00> : vector<8x384xf32>
    %196 = tpu.matmul %195, %12, %cst_32 {dimension_numbers = #tpu.dot_dimension_numbers<[1], [0], [0], [1], [0, 0, 1, 1], [], []>} : vector<8x128xbf16>, vector<128x384xbf16>, vector<8x384xf32> -> vector<8x384xf32>
    %197 = vector.extract_strided_slice %10 {offsets = [48, 0], sizes = [8, 384], strides = [1, 1]} : vector<64x384xf32> to vector<8x384xf32>
    %198 = vector.extract_strided_slice %197 {offsets = [0, 0], sizes = [8, 128], strides = [1, 1]} : vector<8x384xf32> to vector<8x128xf32>
    %199 = vector.extract_strided_slice %196 {offsets = [0, 0], sizes = [8, 128], strides = [1, 1]} : vector<8x384xf32> to vector<8x128xf32>
    %200 = arith.addf %198, %199 : vector<8x128xf32>
    %201 = arith.negf %200 : vector<8x128xf32>
    %202 = math.exp %201 : vector<8x128xf32>
    %cst_33 = arith.constant 1.000000e+00 : f32
    %203 = vector.broadcast %cst_33 : f32 to vector<8x128xf32>
    %204 = arith.addf %203, %202 : vector<8x128xf32>
    %205 = arith.divf %203, %204 : vector<8x128xf32>
    %206 = vector.extract_strided_slice %197 {offsets = [0, 128], sizes = [8, 128], strides = [1, 1]} : vector<8x384xf32> to vector<8x128xf32>
    %207 = vector.extract_strided_slice %196 {offsets = [0, 128], sizes = [8, 128], strides = [1, 1]} : vector<8x384xf32> to vector<8x128xf32>
    %208 = arith.addf %206, %207 : vector<8x128xf32>
    %209 = arith.negf %208 : vector<8x128xf32>
    %210 = math.exp %209 : vector<8x128xf32>
    %cst_34 = arith.constant 1.000000e+00 : f32
    %211 = vector.broadcast %cst_34 : f32 to vector<8x128xf32>
    %212 = arith.addf %211, %210 : vector<8x128xf32>
    %213 = arith.divf %211, %212 : vector<8x128xf32>
    %214 = vector.extract_strided_slice %197 {offsets = [0, 256], sizes = [8, 128], strides = [1, 1]} : vector<8x384xf32> to vector<8x128xf32>
    %215 = vector.extract_strided_slice %196 {offsets = [0, 256], sizes = [8, 128], strides = [1, 1]} : vector<8x384xf32> to vector<8x128xf32>
    %216 = arith.addf %215, %4 : vector<8x128xf32>
    %217 = arith.mulf %205, %216 : vector<8x128xf32>
    %218 = arith.addf %214, %217 : vector<8x128xf32>
    %219 = math.tanh %218 : vector<8x128xf32>
    %cst_35 = arith.constant 1.000000e+00 : f32
    %220 = vector.broadcast %cst_35 : f32 to vector<8x128xf32>
    %221 = arith.subf %220, %213 : vector<8x128xf32>
    %222 = arith.mulf %221, %219 : vector<8x128xf32>
    %223 = arith.mulf %213, %194 : vector<8x128xf32>
    %224 = arith.addf %222, %223 : vector<8x128xf32>
    %225 = arith.truncf %224 : vector<8x128xf32> to vector<8x128xbf16>
    %cst_36 = arith.constant dense<0.000000e+00> : vector<8x384xf32>
    %226 = tpu.matmul %225, %12, %cst_36 {dimension_numbers = #tpu.dot_dimension_numbers<[1], [0], [0], [1], [0, 0, 1, 1], [], []>} : vector<8x128xbf16>, vector<128x384xbf16>, vector<8x384xf32> -> vector<8x384xf32>
    %227 = vector.extract_strided_slice %10 {offsets = [56, 0], sizes = [8, 384], strides = [1, 1]} : vector<64x384xf32> to vector<8x384xf32>
    %228 = vector.extract_strided_slice %227 {offsets = [0, 0], sizes = [8, 128], strides = [1, 1]} : vector<8x384xf32> to vector<8x128xf32>
    %229 = vector.extract_strided_slice %226 {offsets = [0, 0], sizes = [8, 128], strides = [1, 1]} : vector<8x384xf32> to vector<8x128xf32>
    %230 = arith.addf %228, %229 : vector<8x128xf32>
    %231 = arith.negf %230 : vector<8x128xf32>
    %232 = math.exp %231 : vector<8x128xf32>
    %cst_37 = arith.constant 1.000000e+00 : f32
    %233 = vector.broadcast %cst_37 : f32 to vector<8x128xf32>
    %234 = arith.addf %233, %232 : vector<8x128xf32>
    %235 = arith.divf %233, %234 : vector<8x128xf32>
    %236 = vector.extract_strided_slice %227 {offsets = [0, 128], sizes = [8, 128], strides = [1, 1]} : vector<8x384xf32> to vector<8x128xf32>
    %237 = vector.extract_strided_slice %226 {offsets = [0, 128], sizes = [8, 128], strides = [1, 1]} : vector<8x384xf32> to vector<8x128xf32>
    %238 = arith.addf %236, %237 : vector<8x128xf32>
    %239 = arith.negf %238 : vector<8x128xf32>
    %240 = math.exp %239 : vector<8x128xf32>
    %cst_38 = arith.constant 1.000000e+00 : f32
    %241 = vector.broadcast %cst_38 : f32 to vector<8x128xf32>
    %242 = arith.addf %241, %240 : vector<8x128xf32>
    %243 = arith.divf %241, %242 : vector<8x128xf32>
    %244 = vector.extract_strided_slice %227 {offsets = [0, 256], sizes = [8, 128], strides = [1, 1]} : vector<8x384xf32> to vector<8x128xf32>
    %245 = vector.extract_strided_slice %226 {offsets = [0, 256], sizes = [8, 128], strides = [1, 1]} : vector<8x384xf32> to vector<8x128xf32>
    %246 = arith.addf %245, %4 : vector<8x128xf32>
    %247 = arith.mulf %235, %246 : vector<8x128xf32>
    %248 = arith.addf %244, %247 : vector<8x128xf32>
    %249 = math.tanh %248 : vector<8x128xf32>
    %cst_39 = arith.constant 1.000000e+00 : f32
    %250 = vector.broadcast %cst_39 : f32 to vector<8x128xf32>
    %251 = arith.subf %250, %243 : vector<8x128xf32>
    %252 = arith.mulf %251, %249 : vector<8x128xf32>
    %253 = arith.mulf %243, %224 : vector<8x128xf32>
    %254 = arith.addf %252, %253 : vector<8x128xf32>
    %255 = tpu.concatenate %44, %74, %104, %134, %164, %194, %224, %254 in 0 : vector<8x128xf32>, vector<8x128xf32>, vector<8x128xf32>, vector<8x128xf32>, vector<8x128xf32>, vector<8x128xf32>, vector<8x128xf32>, vector<8x128xf32> -> vector<64x128xf32>
    %256 = arith.truncf %255 : vector<64x128xf32> to vector<64x128xbf16>
    %cst_40 = arith.constant dense<0.000000e+00> : vector<64x128xf32>
    %257 = tpu.matmul %256, %13, %cst_40 {dimension_numbers = #tpu.dot_dimension_numbers<[1], [0], [0], [1], [0, 0, 1, 1], [], []>} : vector<64x128xbf16>, vector<128x128xbf16>, vector<64x128xf32> -> vector<64x128xf32>
    %258 = vector.broadcast %5 : vector<1x128xf32> to vector<64x128xf32>
    %259 = arith.addf %257, %258 : vector<64x128xf32>
    %c0_41 = arith.constant 0 : index
    %c0_42 = arith.constant 0 : index
    %260 = vector.load %arg4[%c0_41, %c0_42] : memref<64x128xf32, #tpu.memory_space<vmem>>, vector<64x128xf32>
    tpu.vector_store %arg4[%c0_41, %c0_42], %259 {strides = array<i32>} : memref<64x128xf32, #tpu.memory_space<vmem>>, vector<64x128xf32>,
    return
  }
}

</mosaic_0001>

<llo_original>
// kernel: tpu_custom_call.1
$region0: #{tpu_custom_call.1}
  #allocation0 [shape = 'u32[]', space=smem, size = 0x4, offset = 0x4, fixed_abs, tag = 'smem constant byte address 0x4 - core index']
  #allocation1 [shape = 'u32[144,128]{1,0:T(1,128)}', space=vmem, size = 0x12000, scoped, tag = 'internal scratch']
  %s0 = inlined_call_operand.vmem [shape: bf16[64,16], index: 0, kind: input, shape index: {}]
  %s1 = inlined_call_operand.vmem [shape: bf16[16,384], index: 1, kind: input, shape index: {}]
  %s2 = inlined_call_operand.hbm [shape: bf16[128,512], index: 2, kind: input, shape index: {}]
  %s3 = inlined_call_operand.vmem [shape: f32[8,384], index: 3, kind: input, shape index: {}]
  %s4 = inlined_call_operand.hbm [shape: f32[64,128], index: 4, kind: output, shape index: {}]
  %s5 = sld [smem:[#allocation0]]
  $region30: #{tpu_custom_call.1} parent=0
    _
  %s7 = ssub.s32 1, %s5
  %s8 = scalar_select 0, %s7, %s5
  $region1: #{tpu_custom_call.1} parent=0
    #allocation2 [shape = 'u8[131072]{0}', space=vmem, size = 0x20000, scoped, tag = 'input window, operand 2, single buffered']
    #allocation3 [shape = 's32[1]{0}', space=sflag, size = 0x4, scoped, tag = 'scoped memory for tpu_custom_call.1']
    #allocation4 [shape = 's32[1]{0}', space=sflag, size = 0x4, scoped, tag = 'scoped memory for tpu_custom_call.1']
    #allocation5 [shape = 'u8[32768]{0}', space=vmem, size = 0x8000, scoped, tag = 'output window, operand 0, single buffered']
    %9 = vsyncpa [#allocation3], 0
    %10 = vsyncpa [#allocation4], 0
    // Predicated region
    $region2: #{tpu_custom_call.1} parent=1 // pred_check
      _
    $region3: #{tpu_custom_call.1} parent=1 // pred_check_branch
      %12 = sbr.rel (0) target = $region5
    $region4: #{tpu_custom_call.1} parent=1 // pred_region
      _
    $region5: #{tpu_custom_call.1} parent=1 // pred_fallthru
      _
    // Predicated region
    $region6: #{tpu_custom_call.1} parent=1 // pred_check
      _
    $region7: #{tpu_custom_call.1} parent=1 // pred_check_branch
      %14 = sbr.rel (0) target = $region9
    $region8: #{tpu_custom_call.1} parent=1 // pred_region
      _
    $region9: #{tpu_custom_call.1} parent=1 // pred_fallthru
      _
    // Predicated region
    $region10: #{tpu_custom_call.1} parent=1 // pred_check
      _
    $region11: #{tpu_custom_call.1} parent=1 // pred_check_branch
      %16 = sbr.rel (0) target = $region13
    $region12: #{tpu_custom_call.1} parent=1 // pred_region
      %s18 = ssub.s32 4096, 4096
      %19 = vsyncadd [#allocation3], %s18
      %s20 = sshll.u32 [#allocation2], 4
      %s21 = int_to_ptr.vmem [resolvable:$true] %s20
      %26 = dma.hbm_to_vmem [thread:$0]  %s2, 4096, %s21, [#allocation3], 256, 256, 16
    $region13: #{tpu_custom_call.1} parent=1 // pred_fallthru
      _
    // Predicated region
    $region14: #{tpu_custom_call.1} parent=1 // pred_check
      _
    $region15: #{tpu_custom_call.1} parent=1 // pred_check_branch
      %28 = sbr.rel (0) target = $region17
    $region16: #{tpu_custom_call.1} parent=1 // pred_region
      _
    $region17: #{tpu_custom_call.1} parent=1 // pred_fallthru
      _
    // Predicated region
    $region18: #{tpu_custom_call.1} parent=1 // pred_check
      _
    $region19: #{tpu_custom_call.1} parent=1 // pred_check_branch
      %30 = sbr.rel (0) target = $region21
    $region20: #{tpu_custom_call.1} parent=1 // pred_region
      %31 = dma.done [#allocation3], 4096
    $region21: #{tpu_custom_call.1} parent=1 // pred_fallthru
      _
    %v33 = vld [vmem:[%s3] sm:$0xff]
    %v34 = vld [vmem:[%s3 + $0x8] sm:$0xff]
    %v35 = vld [vmem:[%s3 + $0x10] sm:$0xff]
    %v36 = vlaneseq
    %v37 = vshrl.u32 %v36, 7
    %v38 = vsub.s32 1, %v37
    %v39 = vrot.slane %v33, %v38
    %v40 = vld [vmem:[%s0] sm:$0xf]
    %v41 = vld [vmem:[%s0 + $0x4] sm:$0xf]
    %v42 = vld [vmem:[%s0 + $0x8] sm:$0xf]
    %v43 = vld [vmem:[%s0 + $0xc] sm:$0xf]
    %v44 = vld [vmem:[%s0 + $0x10] sm:$0xf]
    %v45 = vld [vmem:[%s0 + $0x14] sm:$0xf]
    %v46 = vld [vmem:[%s0 + $0x18] sm:$0xf]
    %v47 = vld [vmem:[%s0 + $0x1c] sm:$0xf]
    %v48 = vld [vmem:[%s1] sm:$0xff]
    %v49 = vld [vmem:[%s1 + $0x8] sm:$0xf]
    %v50 = vld [vmem:[%s1 + $0xc] sm:$0xff]
    %v51 = vld [vmem:[%s1 + $0x14] sm:$0xf]
    %v52 = vlaneseq
    %v53 = vshrl.u32 %v52, 7
    %v54 = vsub.s32 0, %v53
    %v55 = vrot.slane %v33, %v54
    %v56 = vlaneseq
    %v57 = vshrl.u32 %v56, 7
    %v58 = vsub.s32 0, %v57
    %v59 = vrot.slane %v34, %v58
    %v60 = vlaneseq
    %v61 = vshrl.u32 %v60, 7
    %v62 = vsub.s32 0, %v61
    %v63 = vrot.slane %v35, %v62
    %v72 = vunpack.c.l.b16 %v40
    %v73 = vunpack.c.l.b16 %v41
    %v74 = vunpack.c.l.b16 %v42
    %v75 = vunpack.c.l.b16 %v43
    %v76 = vunpack.c.l.b16 %v44
    %v77 = vunpack.c.l.b16 %v45
    %v78 = vunpack.c.l.b16 %v46
    %v79 = vunpack.c.l.b16 %v47
    %v80 = vpack.c.b16 %v73, %v72
    %v81 = vpack.c.b16 %v75, %v74
    %v82 = vpack.c.b16 %v77, %v76
    %v83 = vpack.c.b16 %v79, %v78
    %v88 = vunpack.c.l.b16 %v48
    %v89 = vunpack.c.h.b16 %v48
    %v90 = vunpack.c.l.b16 %v49
    %v91 = vunpack.c.l.b16 %v50
    %v92 = vunpack.c.h.b16 %v50
    %v93 = vunpack.c.l.b16 %v51
    %v94 = vpack.c.b16 %v91, %v88
    %v95 = vpack.c.b16 %v92, %v89
    %v96 = vpack.c.b16 %v93, %v90
    %vm100 = vcmask 130048
    %v102 = vsel %vm100, %v80, 0
    %v105 = vsel %vm100, %v81, 0
    %v108 = vsel %vm100, %v82, 0
    %v111 = vsel %vm100, %v83, 0
    %113 = vmatprep.subr.bf16.mxu0 %v95
    %114 = vmatpush1.bf16.msra.mxu0 %v94
    %115 = vmatprep.subr.bf16.mxu0 0
    %116 = vmatpush1.bf16.msra.mxu0 0
    %117 = vmatprep.subr.bf16.mxu0 0
    %118 = vmatpush1.bf16.msra.mxu0 0
    %119 = vmatprep.subr.bf16.mxu0 0
    %120 = vmatpush1.bf16.msra.mxu0 0
    %121 = vmatprep.subr.bf16.mxu0 0
    %122 = vmatpush1.bf16.msra.mxu0 0
    %123 = vmatprep.subr.bf16.mxu0 0
    %124 = vmatpush1.bf16.msra.mxu0 0
    %125 = vmatprep.subr.bf16.mxu0 0
    %126 = vmatpush1.bf16.msra.mxu0 0
    %127 = vmatprep.subr.bf16.mxu0 0
    %128 = vmatpush1.bf16.msra.mxu0 0
    %129 = vmatprep.subr.bf16.mxu0 0
    %130 = vmatpush1.bf16.msra.mxu0 0
    %131 = vmatprep.subr.bf16.mxu0 0
    %132 = vmatpush1.bf16.msra.mxu0 0
    %133 = vmatprep.subr.bf16.mxu0 0
    %134 = vmatpush1.bf16.msra.mxu0 0
    %135 = vmatprep.subr.bf16.mxu0 0
    %136 = vmatpush1.bf16.msra.mxu0 0
    %137 = vmatprep.subr.bf16.mxu0 0
    %138 = vmatpush1.bf16.msra.mxu0 0
    %139 = vmatprep.subr.bf16.mxu0 0
    %140 = vmatpush1.bf16.msra.mxu0 0
    %141 = vmatprep.subr.bf16.mxu0 0
    %142 = vmatpush1.bf16.msra.mxu0 0
    %143 = vmatprep.subr.bf16.mxu0 0
    %144 = vmatpush1.bf16.msra.mxu0 0
    %145 = vmatprep.mubr.bf16.mxu0 0
    %146 = vmatmul.mubr.bf16.gmra.mrb[0].mxu0 %v102
    %v147 = vpop.f32.mrb[0].mxu0
    %v148 = vadd.f32 %v55, %v147
    %v149 = vpop.f32.mrb[0].mxu0
    %v150 = vadd.f32 %v59, %v149
    %v151 = vpop.f32.mrb[0].mxu0
    %v152 = vadd.f32 %v55, %v151
    %v153 = vpop.f32.mrb[0].mxu0
    %v154 = vadd.f32 %v59, %v153
    %155 = vmatprep.mubr.bf16.mxu0 0
    %156 = vmatmul.mubr.bf16.gmra.mrb[0].mxu0 %v105
    %v157 = vpop.f32.mrb[0].mxu0
    %v158 = vadd.f32 %v55, %v157
    %v159 = vpop.f32.mrb[0].mxu0
    %v160 = vadd.f32 %v59, %v159
    %v161 = vpop.f32.mrb[0].mxu0
    %v162 = vadd.f32 %v55, %v161
    %v163 = vpop.f32.mrb[0].mxu0
    %v164 = vadd.f32 %v59, %v163
    %165 = vmatprep.mubr.bf16.mxu0 0
    %166 = vmatmul.mubr.bf16.gmra.mrb[0].mxu0 %v108
    %v167 = vpop.f32.mrb[0].mxu0
    %v168 = vadd.f32 %v55, %v167
    %v169 = vpop.f32.mrb[0].mxu0
    %v170 = vadd.f32 %v59, %v169
    %v171 = vpop.f32.mrb[0].mxu0
    %v172 = vadd.f32 %v55, %v171
    %v173 = vpop.f32.mrb[0].mxu0
    %v174 = vadd.f32 %v59, %v173
    %175 = vmatprep.mubr.bf16.mxu0 0
    %176 = vmatmul.mubr.bf16.gmra.mrb[0].mxu0 %v111
    %v177 = vpop.f32.mrb[0].mxu0
    %v178 = vadd.f32 %v55, %v177
    %v179 = vpop.f32.mrb[0].mxu0
    %v180 = vadd.f32 %v59, %v179
    %v181 = vpop.f32.mrb[0].mxu0
    %v182 = vadd.f32 %v55, %v181
    %v183 = vpop.f32.mrb[0].mxu0
    %v184 = vadd.f32 %v59, %v183
    %185 = vdwg.mxu0
    %186 = vmatprep.subr.bf16.mxu0 0
    %187 = vmatpush1.bf16.msra.mxu0 %v96
    %188 = vmatprep.subr.bf16.mxu0 0
    %189 = vmatpush1.bf16.msra.mxu0 0
    %190 = vmatprep.subr.bf16.mxu0 0
    %191 = vmatpush1.bf16.msra.mxu0 0
    %192 = vmatprep.subr.bf16.mxu0 0
    %193 = vmatpush1.bf16.msra.mxu0 0
    %194 = vmatprep.subr.bf16.mxu0 0
    %195 = vmatpush1.bf16.msra.mxu0 0
    %196 = vmatprep.subr.bf16.mxu0 0
    %197 = vmatpush1.bf16.msra.mxu0 0
    %198 = vmatprep.subr.bf16.mxu0 0
    %199 = vmatpush1.bf16.msra.mxu0 0
    %200 = vmatprep.subr.bf16.mxu0 0
    %201 = vmatpush1.bf16.msra.mxu0 0
    %202 = vmatprep.subr.bf16.mxu0 0
    %203 = vmatpush1.bf16.msra.mxu0 0
    %204 = vmatprep.subr.bf16.mxu0 0
    %205 = vmatpush1.bf16.msra.mxu0 0
    %206 = vmatprep.subr.bf16.mxu0 0
    %207 = vmatpush1.bf16.msra.mxu0 0
    %208 = vmatprep.subr.bf16.mxu0 0
    %209 = vmatpush1.bf16.msra.mxu0 0
    %210 = vmatprep.subr.bf16.mxu0 0
    %211 = vmatpush1.bf16.msra.mxu0 0
    %212 = vmatprep.subr.bf16.mxu0 0
    %213 = vmatpush1.bf16.msra.mxu0 0
    %214 = vmatprep.subr.bf16.mxu0 0
    %215 = vmatpush1.bf16.msra.mxu0 0
    %216 = vmatprep.subr.bf16.mxu0 0
    %217 = vmatpush1.bf16.msra.mxu0 0
    %218 = vmatprep.mubr.bf16.mxu0 0
    %219 = vmatmul.mubr.bf16.gmra.mrb[0].mxu0 %v102
    %v220 = vpop.f32.mrb[0].mxu0
    %v221 = vadd.f32 %v63, %v220
    %v222 = vpop.f32.mrb[0].mxu0
    %v223 = vpop.f32.mrb[0].mxu0
    %v224 = vadd.f32 %v63, %v223
    %v225 = vpop.f32.mrb[0].mxu0
    %226 = vmatprep.mubr.bf16.mxu0 0
    %227 = vmatmul.mubr.bf16.gmra.mrb[0].mxu0 %v105
    %v228 = vpop.f32.mrb[0].mxu0
    %v229 = vadd.f32 %v63, %v228
    %v230 = vpop.f32.mrb[0].mxu0
    %v231 = vpop.f32.mrb[0].mxu0
    %v232 = vadd.f32 %v63, %v231
    %v233 = vpop.f32.mrb[0].mxu0
    %234 = vmatprep.mubr.bf16.mxu0 0
    %235 = vmatmul.mubr.bf16.gmra.mrb[0].mxu0 %v108
    %v236 = vpop.f32.mrb[0].mxu0
    %v237 = vadd.f32 %v63, %v236
    %v238 = vpop.f32.mrb[0].mxu0
    %v239 = vpop.f32.mrb[0].mxu0
    %v240 = vadd.f32 %v63, %v239
    %v241 = vpop.f32.mrb[0].mxu0
    %242 = vmatprep.mubr.bf16.mxu0 0
    %243 = vmatmul.mubr.bf16.gmra.mrb[0].mxu0 %v111
    %v244 = vpop.f32.mrb[0].mxu0
    %v245 = vadd.f32 %v63, %v244
    %v246 = vpop.f32.mrb[0].mxu0
    %v247 = vpop.f32.mrb[0].mxu0
    %v248 = vadd.f32 %v63, %v247
    %v249 = vpop.f32.mrb[0].mxu0
    %250 = vdwg.mxu0
    %v251 = vld [vmem:[#allocation2] sm:$0xff]
    %v252 = vld [vmem:[#allocation2 + $0x8] sm:$0xff]
    %v253 = vld [vmem:[#allocation2 + $0x10] sm:$0xff]
    %v254 = vld [vmem:[#allocation2 + $0x18] sm:$0xff]
    %v255 = vld [vmem:[#allocation2 + $0x20] sm:$0xff]
    %v256 = vld [vmem:[#allocation2 + $0x28] sm:$0xff]
    %v257 = vld [vmem:[#allocation2 + $0x30] sm:$0xff]
    %v258 = vld [vmem:[#allocation2 + $0x38] sm:$0xff]
    %v259 = vld [vmem:[#allocation2 + $0x40] sm:$0xff]
    %v260 = vld [vmem:[#allocation2 + $0x48] sm:$0xff]
    %v261 = vld [vmem:[#allocation2 + $0x50] sm:$0xff]
    %v262 = vld [vmem:[#allocation2 + $0x58] sm:$0xff]
    %v263 = vld [vmem:[#allocation2 + $0x60] sm:$0xff]
    %v264 = vld [vmem:[#allocation2 + $0x68] sm:$0xff]
    %v265 = vld [vmem:[#allocation2 + $0x70] sm:$0xff]
    %v266 = vld [vmem:[#allocation2 + $0x78] sm:$0xff]
    %v267 = vld [vmem:[#allocation2 + $0x80] sm:$0xff]
    %v268 = vld [vmem:[#allocation2 + $0x88] sm:$0xff]
    %v269 = vld [vmem:[#allocation2 + $0x90] sm:$0xff]
    %v270 = vld [vmem:[#allocation2 + $0x98] sm:$0xff]
    %v271 = vld [vmem:[#allocation2 + $0xa0] sm:$0xff]
    %v272 = vld [vmem:[#allocation2 + $0xa8] sm:$0xff]
    %v273 = vld [vmem:[#allocation2 + $0xb0] sm:$0xff]
    %v274 = vld [vmem:[#allocation2 + $0xb8] sm:$0xff]
    %v275 = vld [vmem:[#allocation2 + $0xc0] sm:$0xff]
    %v276 = vld [vmem:[#allocation2 + $0xc8] sm:$0xff]
    %v277 = vld [vmem:[#allocation2 + $0xd0] sm:$0xff]
    %v278 = vld [vmem:[#allocation2 + $0xd8] sm:$0xff]
    %v279 = vld [vmem:[#allocation2 + $0xe0] sm:$0xff]
    %v280 = vld [vmem:[#allocation2 + $0xe8] sm:$0xff]
    %v281 = vld [vmem:[#allocation2 + $0xf0] sm:$0xff]
    %v282 = vld [vmem:[#allocation2 + $0xf8] sm:$0xff]
    %v315 = vunpack.c.l.b16 %v251
    %v316 = vunpack.c.h.b16 %v251
    %v317 = vunpack.c.l.b16 %v252
    %v318 = vunpack.c.l.b16 %v253
    %v319 = vunpack.c.h.b16 %v253
    %v320 = vunpack.c.l.b16 %v254
    %v321 = vunpack.c.l.b16 %v255
    %v322 = vunpack.c.h.b16 %v255
    %v323 = vunpack.c.l.b16 %v256
    %v324 = vunpack.c.l.b16 %v257
    %v325 = vunpack.c.h.b16 %v257
    %v326 = vunpack.c.l.b16 %v258
    %v327 = vunpack.c.l.b16 %v259
    %v328 = vunpack.c.h.b16 %v259
    %v329 = vunpack.c.l.b16 %v260
    %v330 = vunpack.c.l.b16 %v261
    %v331 = vunpack.c.h.b16 %v261
    %v332 = vunpack.c.l.b16 %v262
    %v333 = vunpack.c.l.b16 %v263
    %v334 = vunpack.c.h.b16 %v263
    %v335 = vunpack.c.l.b16 %v264
    %v336 = vunpack.c.l.b16 %v265
    %v337 = vunpack.c.h.b16 %v265
    %v338 = vunpack.c.l.b16 %v266
    %v339 = vunpack.c.l.b16 %v267
    %v340 = vunpack.c.h.b16 %v267
    %v341 = vunpack.c.l.b16 %v268
    %v342 = vunpack.c.l.b16 %v269
    %v343 = vunpack.c.h.b16 %v269
    %v344 = vunpack.c.l.b16 %v270
    %v345 = vunpack.c.l.b16 %v271
    %v346 = vunpack.c.h.b16 %v271
    %v347 = vunpack.c.l.b16 %v272
    %v348 = vunpack.c.l.b16 %v273
    %v349 = vunpack.c.h.b16 %v273
    %v350 = vunpack.c.l.b16 %v274
    %v351 = vunpack.c.l.b16 %v275
    %v352 = vunpack.c.h.b16 %v275
    %v353 = vunpack.c.l.b16 %v276
    %v354 = vunpack.c.l.b16 %v277
    %v355 = vunpack.c.h.b16 %v277
    %v356 = vunpack.c.l.b16 %v278
    %v357 = vunpack.c.l.b16 %v279
    %v358 = vunpack.c.h.b16 %v279
    %v359 = vunpack.c.l.b16 %v280
    %v360 = vunpack.c.l.b16 %v281
    %v361 = vunpack.c.h.b16 %v281
    %v362 = vunpack.c.l.b16 %v282
    %v363 = vpack.c.b16 %v318, %v315
    %v364 = vpack.c.b16 %v319, %v316
    %v365 = vpack.c.b16 %v320, %v317
    %v366 = vpack.c.b16 %v324, %v321
    %v367 = vpack.c.b16 %v325, %v322
    %v368 = vpack.c.b16 %v326, %v323
    %v369 = vpack.c.b16 %v330, %v327
    %v370 = vpack.c.b16 %v331, %v328
    %v371 = vpack.c.b16 %v332, %v329
    %v372 = vpack.c.b16 %v336, %v333
    %v373 = vpack.c.b16 %v337, %v334
    %v374 = vpack.c.b16 %v338, %v335
    %v375 = vpack.c.b16 %v342, %v339
    %v376 = vpack.c.b16 %v343, %v340
    %v377 = vpack.c.b16 %v344, %v341
    %v378 = vpack.c.b16 %v348, %v345
    %v379 = vpack.c.b16 %v349, %v346
    %v380 = vpack.c.b16 %v350, %v347
    %v381 = vpack.c.b16 %v354, %v351
    %v382 = vpack.c.b16 %v355, %v352
    %v383 = vpack.c.b16 %v356, %v353
    %v384 = vpack.c.b16 %v360, %v357
    %v385 = vpack.c.b16 %v361, %v358
    %v386 = vpack.c.b16 %v362, %v359
    %411 = vmatprep.subr.bf16.mxu0 %v364
    %412 = vmatpush1.bf16.msra.mxu0 %v363
    %413 = vmatprep.subr.bf16.mxu0 %v367
    %414 = vmatpush1.bf16.msra.mxu0 %v366
    %415 = vmatprep.subr.bf16.mxu0 %v370
    %416 = vmatpush1.bf16.msra.mxu0 %v369
    %417 = vmatprep.subr.bf16.mxu0 %v373
    %418 = vmatpush1.bf16.msra.mxu0 %v372
    %419 = vmatprep.subr.bf16.mxu0 %v376
    %420 = vmatpush1.bf16.msra.mxu0 %v375
    %421 = vmatprep.subr.bf16.mxu0 %v379
    %422 = vmatpush1.bf16.msra.mxu0 %v378
    %423 = vmatprep.subr.bf16.mxu0 %v382
    %424 = vmatpush1.bf16.msra.mxu0 %v381
    %425 = vmatprep.subr.bf16.mxu0 %v385
    %426 = vmatpush1.bf16.msra.mxu0 %v384
    %427 = vmatprep.subr.bf16.mxu0 0
    %428 = vmatpush1.bf16.msra.mxu0 0
    %429 = vmatprep.subr.bf16.mxu0 0
    %430 = vmatpush1.bf16.msra.mxu0 0
    %431 = vmatprep.subr.bf16.mxu0 0
    %432 = vmatpush1.bf16.msra.mxu0 0
    %433 = vmatprep.subr.bf16.mxu0 0
    %434 = vmatpush1.bf16.msra.mxu0 0
    %435 = vmatprep.subr.bf16.mxu0 0
    %436 = vmatpush1.bf16.msra.mxu0 0
    %437 = vmatprep.subr.bf16.mxu0 0
    %438 = vmatpush1.bf16.msra.mxu0 0
    %439 = vmatprep.subr.bf16.mxu0 0
    %440 = vmatpush1.bf16.msra.mxu0 0
    %441 = vmatprep.subr.bf16.mxu0 0
    %442 = vmatpush1.bf16.msra.mxu0 0
    %443 = vmatprep.mubr.bf16.mxu0 0
    %444 = vmatmul.mubr.bf16.gmra.mrb[0].mxu0 0
    %v445 = vpop.f32.mrb[0].mxu0
    %v446 = vadd.f32 0.0, %v445
    %v447 = vpop.f32.mrb[0].mxu0
    %v448 = vadd.f32 0.0, %v447
    %v449 = vpop.f32.mrb[0].mxu0
    %v450 = vpop.f32.mrb[0].mxu0
    %451 = vdwg.mxu0
    %452 = vmatprep.subr.bf16.mxu0 0
    %453 = vmatpush1.bf16.msra.mxu0 %v365
    %454 = vmatprep.subr.bf16.mxu0 0
    %455 = vmatpush1.bf16.msra.mxu0 %v368
    %456 = vmatprep.subr.bf16.mxu0 0
    %457 = vmatpush1.bf16.msra.mxu0 %v371
    %458 = vmatprep.subr.bf16.mxu0 0
    %459 = vmatpush1.bf16.msra.mxu0 %v374
    %460 = vmatprep.subr.bf16.mxu0 0
    %461 = vmatpush1.bf16.msra.mxu0 %v377
    %462 = vmatprep.subr.bf16.mxu0 0
    %463 = vmatpush1.bf16.msra.mxu0 %v380
    %464 = vmatprep.subr.bf16.mxu0 0
    %465 = vmatpush1.bf16.msra.mxu0 %v383
    %466 = vmatprep.subr.bf16.mxu0 0
    %467 = vmatpush1.bf16.msra.mxu0 %v386
    %468 = vmatprep.subr.bf16.mxu0 0
    %469 = vmatpush1.bf16.msra.mxu0 0
    %470 = vmatprep.subr.bf16.mxu0 0
    %471 = vmatpush1.bf16.msra.mxu0 0
    %472 = vmatprep.subr.bf16.mxu0 0
    %473 = vmatpush1.bf16.msra.mxu0 0
    %474 = vmatprep.subr.bf16.mxu0 0
    %475 = vmatpush1.bf16.msra.mxu0 0
    %476 = vmatprep.subr.bf16.mxu0 0
    %477 = vmatpush1.bf16.msra.mxu0 0
    %478 = vmatprep.subr.bf16.mxu0 0
    %479 = vmatpush1.bf16.msra.mxu0 0
    %480 = vmatprep.subr.bf16.mxu0 0
    %481 = vmatpush1.bf16.msra.mxu0 0
    %482 = vmatprep.subr.bf16.mxu0 0
    %483 = vmatpush1.bf16.msra.mxu0 0
    %484 = vmatprep.mubr.bf16.mxu0 0
    %485 = vmatmul.mubr.bf16.gmra.mrb[0].mxu0 0
    %v486 = vpop.f32.mrb[0].mxu0
    %v487 = vadd.f32 0.0, %v486
    %v488 = vpop.f32.mrb[0].mxu0
    %v489 = vpop.f32.mrb[0].mxu0
    %v490 = vpop.f32.mrb[0].mxu0
    %491 = vdwg.mxu0
    %v492 = vadd.f32 %v148, %v446
    %v493 = vxor.u32 %v492, 2147483648
    %v494 = vmul.f32 %v493, 1.442695
    %v495 = vpow.pop %v494
    %v496 = vadd.f32 %v495, 1.0
    %v497 = vrcp.pop %v496
    %v498 = vmul.f32 1.0, %v497
    %v499 = vadd.f32 %v150, %v448
    %v500 = vxor.u32 %v499, 2147483648
    %v501 = vmul.f32 %v500, 1.442695
    %v502 = vpow.pop %v501
    %v503 = vadd.f32 %v502, 1.0
    %v504 = vrcp.pop %v503
    %v505 = vmul.f32 1.0, %v504
    %v506 = vadd.f32 %v487, %v39
    %v507 = vmul.f32 %v498, %v506
    %v508 = vadd.f32 %v221, %v507
    %v509 = vtanh.pop %v508
    %v510 = vsub.f32 1.0, %v505
    %v511 = vmul.f32 %v510, %v509
    %v512 = vmul.f32 %v505, 0.0
    %v513 = vadd.f32 %v511, %v512
    %v514 = vpack.c.bf16 %v513, %v513
    %515 = vmatprep.subr.bf16.mxu0 %v364
    %516 = vmatpush1.bf16.msra.mxu0 %v363
    %517 = vmatprep.subr.bf16.mxu0 %v367
    %518 = vmatpush1.bf16.msra.mxu0 %v366
    %519 = vmatprep.subr.bf16.mxu0 %v370
    %520 = vmatpush1.bf16.msra.mxu0 %v369
    %521 = vmatprep.subr.bf16.mxu0 %v373
    %522 = vmatpush1.bf16.msra.mxu0 %v372
    %523 = vmatprep.subr.bf16.mxu0 %v376
    %524 = vmatpush1.bf16.msra.mxu0 %v375
    %525 = vmatprep.subr.bf16.mxu0 %v379
    %526 = vmatpush1.bf16.msra.mxu0 %v378
    %527 = vmatprep.subr.bf16.mxu0 %v382
    %528 = vmatpush1.bf16.msra.mxu0 %v381
    %529 = vmatprep.subr.bf16.mxu0 %v385
    %530 = vmatpush1.bf16.msra.mxu0 %v384
    %531 = vmatprep.subr.bf16.mxu0 0
    %532 = vmatpush1.bf16.msra.mxu0 0
    %533 = vmatprep.subr.bf16.mxu0 0
    %534 = vmatpush1.bf16.msra.mxu0 0
    %535 = vmatprep.subr.bf16.mxu0 0
    %536 = vmatpush1.bf16.msra.mxu0 0
    %537 = vmatprep.subr.bf16.mxu0 0
    %538 = vmatpush1.bf16.msra.mxu0 0
    %539 = vmatprep.subr.bf16.mxu0 0
    %540 = vmatpush1.bf16.msra.mxu0 0
    %541 = vmatprep.subr.bf16.mxu0 0
    %542 = vmatpush1.bf16.msra.mxu0 0
    %543 = vmatprep.subr.bf16.mxu0 0
    %544 = vmatpush1.bf16.msra.mxu0 0
    %545 = vmatprep.subr.bf16.mxu0 0
    %546 = vmatpush1.bf16.msra.mxu0 0
    %547 = vmatprep.mubr.bf16.mxu0 0
    %548 = vmatmul.mubr.bf16.gmra.mrb[0].mxu0 %v514
    %v549 = vpop.f32.mrb[0].mxu0
    %v550 = vadd.f32 0.0, %v549
    %v551 = vpop.f32.mrb[0].mxu0
    %v552 = vadd.f32 0.0, %v551
    %v553 = vpop.f32.mrb[0].mxu0
    %v554 = vpop.f32.mrb[0].mxu0
    %555 = vdwg.mxu0
    %556 = vmatprep.subr.bf16.mxu0 0
    %557 = vmatpush1.bf16.msra.mxu0 %v365
    %558 = vmatprep.subr.bf16.mxu0 0
    %559 = vmatpush1.bf16.msra.mxu0 %v368
    %560 = vmatprep.subr.bf16.mxu0 0
    %561 = vmatpush1.bf16.msra.mxu0 %v371
    %562 = vmatprep.subr.bf16.mxu0 0
    %563 = vmatpush1.bf16.msra.mxu0 %v374
    %564 = vmatprep.subr.bf16.mxu0 0
    %565 = vmatpush1.bf16.msra.mxu0 %v377
    %566 = vmatprep.subr.bf16.mxu0 0
    %567 = vmatpush1.bf16.msra.mxu0 %v380
    %568 = vmatprep.subr.bf16.mxu0 0
    %569 = vmatpush1.bf16.msra.mxu0 %v383
    %570 = vmatprep.subr.bf16.mxu0 0
    %571 = vmatpush1.bf16.msra.mxu0 %v386
    %572 = vmatprep.subr.bf16.mxu0 0
    %573 = vmatpush1.bf16.msra.mxu0 0
    %574 = vmatprep.subr.bf16.mxu0 0
    %575 = vmatpush1.bf16.msra.mxu0 0
    %576 = vmatprep.subr.bf16.mxu0 0
    %577 = vmatpush1.bf16.msra.mxu0 0
    %578 = vmatprep.subr.bf16.mxu0 0
    %579 = vmatpush1.bf16.msra.mxu0 0
    %580 = vmatprep.subr.bf16.mxu0 0
    %581 = vmatpush1.bf16.msra.mxu0 0
    %582 = vmatprep.subr.bf16.mxu0 0
    %583 = vmatpush1.bf16.msra.mxu0 0
    %584 = vmatprep.subr.bf16.mxu0 0
    %585 = vmatpush1.bf16.msra.mxu0 0
    %586 = vmatprep.subr.bf16.mxu0 0
    %587 = vmatpush1.bf16.msra.mxu0 0
    %588 = vmatprep.mubr.bf16.mxu0 0
    %589 = vmatmul.mubr.bf16.gmra.mrb[0].mxu0 %v514
    %v590 = vpop.f32.mrb[0].mxu0
    %v591 = vadd.f32 0.0, %v590
    %v592 = vpop.f32.mrb[0].mxu0
    %v593 = vpop.f32.mrb[0].mxu0
    %v594 = vpop.f32.mrb[0].mxu0
    %595 = vdwg.mxu0
    %v596 = vadd.f32 %v152, %v550
    %v597 = vxor.u32 %v596, 2147483648
    %v598 = vmul.f32 %v597, 1.442695
    %v599 = vpow.pop %v598
    %v600 = vadd.f32 %v599, 1.0
    %v601 = vrcp.pop %v600
    %v602 = vmul.f32 1.0, %v601
    %v603 = vadd.f32 %v154, %v552
    %v604 = vxor.u32 %v603, 2147483648
    %v605 = vmul.f32 %v604, 1.442695
    %v606 = vpow.pop %v605
    %v607 = vadd.f32 %v606, 1.0
    %v608 = vrcp.pop %v607
    %v609 = vmul.f32 1.0, %v608
    %v610 = vadd.f32 %v591, %v39
    %v611 = vmul.f32 %v602, %v610
    %v612 = vadd.f32 %v224, %v611
    %v613 = vtanh.pop %v612
    %v614 = vsub.f32 1.0, %v609
    %v615 = vmul.f32 %v614, %v613
    %v616 = vmul.f32 %v609, %v513
    %v617 = vadd.f32 %v615, %v616
    %v618 = vpack.c.bf16 %v617, %v617
    %619 = vmatprep.subr.bf16.mxu0 %v364
    %620 = vmatpush1.bf16.msra.mxu0 %v363
    %621 = vmatprep.subr.bf16.mxu0 %v367
    %622 = vmatpush1.bf16.msra.mxu0 %v366
    %623 = vmatprep.subr.bf16.mxu0 %v370
    %624 = vmatpush1.bf16.msra.mxu0 %v369
    %625 = vmatprep.subr.bf16.mxu0 %v373
    %626 = vmatpush1.bf16.msra.mxu0 %v372
    %627 = vmatprep.subr.bf16.mxu0 %v376
    %628 = vmatpush1.bf16.msra.mxu0 %v375
    %629 = vmatprep.subr.bf16.mxu0 %v379
    %630 = vmatpush1.bf16.msra.mxu0 %v378
    %631 = vmatprep.subr.bf16.mxu0 %v382
    %632 = vmatpush1.bf16.msra.mxu0 %v381
    %633 = vmatprep.subr.bf16.mxu0 %v385
    %634 = vmatpush1.bf16.msra.mxu0 %v384
    %635 = vmatprep.subr.bf16.mxu0 0
    %636 = vmatpush1.bf16.msra.mxu0 0
    %637 = vmatprep.subr.bf16.mxu0 0
    %638 = vmatpush1.bf16.msra.mxu0 0
    %639 = vmatprep.subr.bf16.mxu0 0
    %640 = vmatpush1.bf16.msra.mxu0 0
    %641 = vmatprep.subr.bf16.mxu0 0
    %642 = vmatpush1.bf16.msra.mxu0 0
    %643 = vmatprep.subr.bf16.mxu0 0
    %644 = vmatpush1.bf16.msra.mxu0 0
    %645 = vmatprep.subr.bf16.mxu0 0
    %646 = vmatpush1.bf16.msra.mxu0 0
    %647 = vmatprep.subr.bf16.mxu0 0
    %648 = vmatpush1.bf16.msra.mxu0 0
    %649 = vmatprep.subr.bf16.mxu0 0
    %650 = vmatpush1.bf16.msra.mxu0 0
    %651 = vmatprep.mubr.bf16.mxu0 0
    %652 = vmatmul.mubr.bf16.gmra.mrb[0].mxu0 %v618
    %v653 = vpop.f32.mrb[0].mxu0
    %v654 = vadd.f32 0.0, %v653
    %v655 = vpop.f32.mrb[0].mxu0
    %v656 = vadd.f32 0.0, %v655
    %v657 = vpop.f32.mrb[0].mxu0
    %v658 = vpop.f32.mrb[0].mxu0
    %659 = vdwg.mxu0
    %660 = vmatprep.subr.bf16.mxu0 0
    %661 = vmatpush1.bf16.msra.mxu0 %v365
    %662 = vmatprep.subr.bf16.mxu0 0
    %663 = vmatpush1.bf16.msra.mxu0 %v368
    %664 = vmatprep.subr.bf16.mxu0 0
    %665 = vmatpush1.bf16.msra.mxu0 %v371
    %666 = vmatprep.subr.bf16.mxu0 0
    %667 = vmatpush1.bf16.msra.mxu0 %v374
    %668 = vmatprep.subr.bf16.mxu0 0
    %669 = vmatpush1.bf16.msra.mxu0 %v377
    %670 = vmatprep.subr.bf16.mxu0 0
    %671 = vmatpush1.bf16.msra.mxu0 %v380
    %672 = vmatprep.subr.bf16.mxu0 0
    %673 = vmatpush1.bf16.msra.mxu0 %v383
    %674 = vmatprep.subr.bf16.mxu0 0
    %675 = vmatpush1.bf16.msra.mxu0 %v386
    %676 = vmatprep.subr.bf16.mxu0 0
    %677 = vmatpush1.bf16.msra.mxu0 0
    %678 = vmatprep.subr.bf16.mxu0 0
    %679 = vmatpush1.bf16.msra.mxu0 0
    %680 = vmatprep.subr.bf16.mxu0 0
    %681 = vmatpush1.bf16.msra.mxu0 0
    %682 = vmatprep.subr.bf16.mxu0 0
    %683 = vmatpush1.bf16.msra.mxu0 0
    %684 = vmatprep.subr.bf16.mxu0 0
    %685 = vmatpush1.bf16.msra.mxu0 0
    %686 = vmatprep.subr.bf16.mxu0 0
    %687 = vmatpush1.bf16.msra.mxu0 0
    %688 = vmatprep.subr.bf16.mxu0 0
    %689 = vmatpush1.bf16.msra.mxu0 0
    %690 = vmatprep.subr.bf16.mxu0 0
    %691 = vmatpush1.bf16.msra.mxu0 0
    %692 = vmatprep.mubr.bf16.mxu0 0
    %693 = vmatmul.mubr.bf16.gmra.mrb[0].mxu0 %v618
    %v694 = vpop.f32.mrb[0].mxu0
    %v695 = vadd.f32 0.0, %v694
    %v696 = vpop.f32.mrb[0].mxu0
    %v697 = vpop.f32.mrb[0].mxu0
    %v698 = vpop.f32.mrb[0].mxu0
    %699 = vdwg.mxu0
    %v700 = vadd.f32 %v158, %v654
    %v701 = vxor.u32 %v700, 2147483648
    %v702 = vmul.f32 %v701, 1.442695
    %v703 = vpow.pop %v702
    %v704 = vadd.f32 %v703, 1.0
    %v705 = vrcp.pop %v704
    %v706 = vmul.f32 1.0, %v705
    %v707 = vadd.f32 %v160, %v656
    %v708 = vxor.u32 %v707, 2147483648
    %v709 = vmul.f32 %v708, 1.442695
    %v710 = vpow.pop %v709
    %v711 = vadd.f32 %v710, 1.0
    %v712 = vrcp.pop %v711
    %v713 = vmul.f32 1.0, %v712
    %v714 = vadd.f32 %v695, %v39
    %v715 = vmul.f32 %v706, %v714
    %v716 = vadd.f32 %v229, %v715
    %v717 = vtanh.pop %v716
    %v718 = vsub.f32 1.0, %v713
    %v719 = vmul.f32 %v718, %v717
    %v720 = vmul.f32 %v713, %v617
    %v721 = vadd.f32 %v719, %v720
    %v722 = vpack.c.bf16 %v721, %v721
    %723 = vmatprep.subr.bf16.mxu0 %v364
    %724 = vmatpush1.bf16.msra.mxu0 %v363
    %725 = vmatprep.subr.bf16.mxu0 %v367
    %726 = vmatpush1.bf16.msra.mxu0 %v366
    %727 = vmatprep.subr.bf16.mxu0 %v370
    %728 = vmatpush1.bf16.msra.mxu0 %v369
    %729 = vmatprep.subr.bf16.mxu0 %v373
    %730 = vmatpush1.bf16.msra.mxu0 %v372
    %731 = vmatprep.subr.bf16.mxu0 %v376
    %732 = vmatpush1.bf16.msra.mxu0 %v375
    %733 = vmatprep.subr.bf16.mxu0 %v379
    %734 = vmatpush1.bf16.msra.mxu0 %v378
    %735 = vmatprep.subr.bf16.mxu0 %v382
    %736 = vmatpush1.bf16.msra.mxu0 %v381
    %737 = vmatprep.subr.bf16.mxu0 %v385
    %738 = vmatpush1.bf16.msra.mxu0 %v384
    %739 = vmatprep.subr.bf16.mxu0 0
    %740 = vmatpush1.bf16.msra.mxu0 0
    %741 = vmatprep.subr.bf16.mxu0 0
    %742 = vmatpush1.bf16.msra.mxu0 0
    %743 = vmatprep.subr.bf16.mxu0 0
    %744 = vmatpush1.bf16.msra.mxu0 0
    %745 = vmatprep.subr.bf16.mxu0 0
    %746 = vmatpush1.bf16.msra.mxu0 0
    %747 = vmatprep.subr.bf16.mxu0 0
    %748 = vmatpush1.bf16.msra.mxu0 0
    %749 = vmatprep.subr.bf16.mxu0 0
    %750 = vmatpush1.bf16.msra.mxu0 0
    %751 = vmatprep.subr.bf16.mxu0 0
    %752 = vmatpush1.bf16.msra.mxu0 0
    %753 = vmatprep.subr.bf16.mxu0 0
    %754 = vmatpush1.bf16.msra.mxu0 0
    %755 = vmatprep.mubr.bf16.mxu0 0
    %756 = vmatmul.mubr.bf16.gmra.mrb[0].mxu0 %v722
    %v757 = vpop.f32.mrb[0].mxu0
    %v758 = vadd.f32 0.0, %v757
    %v759 = vpop.f32.mrb[0].mxu0
    %v760 = vadd.f32 0.0, %v759
    %v761 = vpop.f32.mrb[0].mxu0
    %v762 = vpop.f32.mrb[0].mxu0
    %763 = vdwg.mxu0
    %764 = vmatprep.subr.bf16.mxu0 0
    %765 = vmatpush1.bf16.msra.mxu0 %v365
    %766 = vmatprep.subr.bf16.mxu0 0
    %767 = vmatpush1.bf16.msra.mxu0 %v368
    %768 = vmatprep.subr.bf16.mxu0 0
    %769 = vmatpush1.bf16.msra.mxu0 %v371
    %770 = vmatprep.subr.bf16.mxu0 0
    %771 = vmatpush1.bf16.msra.mxu0 %v374
    %772 = vmatprep.subr.bf16.mxu0 0
    %773 = vmatpush1.bf16.msra.mxu0 %v377
    %774 = vmatprep.subr.bf16.mxu0 0
    %775 = vmatpush1.bf16.msra.mxu0 %v380
    %776 = vmatprep.subr.bf16.mxu0 0
    %777 = vmatpush1.bf16.msra.mxu0 %v383
    %778 = vmatprep.subr.bf16.mxu0 0
    %779 = vmatpush1.bf16.msra.mxu0 %v386
    %780 = vmatprep.subr.bf16.mxu0 0
    %781 = vmatpush1.bf16.msra.mxu0 0
    %782 = vmatprep.subr.bf16.mxu0 0
    %783 = vmatpush1.bf16.msra.mxu0 0
    %784 = vmatprep.subr.bf16.mxu0 0
    %785 = vmatpush1.bf16.msra.mxu0 0
    %786 = vmatprep.subr.bf16.mxu0 0
    %787 = vmatpush1.bf16.msra.mxu0 0
    %788 = vmatprep.subr.bf16.mxu0 0
    %789 = vmatpush1.bf16.msra.mxu0 0
    %790 = vmatprep.subr.bf16.mxu0 0
    %791 = vmatpush1.bf16.msra.mxu0 0
    %792 = vmatprep.subr.bf16.mxu0 0
    %793 = vmatpush1.bf16.msra.mxu0 0
    %794 = vmatprep.subr.bf16.mxu0 0
    %795 = vmatpush1.bf16.msra.mxu0 0
    %796 = vmatprep.mubr.bf16.mxu0 0
    %797 = vmatmul.mubr.bf16.gmra.mrb[0].mxu0 %v722
    %v798 = vpop.f32.mrb[0].mxu0
    %v799 = vadd.f32 0.0, %v798
    %v800 = vpop.f32.mrb[0].mxu0
    %v801 = vpop.f32.mrb[0].mxu0
    %v802 = vpop.f32.mrb[0].mxu0
    %803 = vdwg.mxu0
    %v804 = vadd.f32 %v162, %v758
    %v805 = vxor.u32 %v804, 2147483648
    %v806 = vmul.f32 %v805, 1.442695
    %v807 = vpow.pop %v806
    %v808 = vadd.f32 %v807, 1.0
    %v809 = vrcp.pop %v808
    %v810 = vmul.f32 1.0, %v809
    %v811 = vadd.f32 %v164, %v760
    %v812 = vxor.u32 %v811, 2147483648
    %v813 = vmul.f32 %v812, 1.442695
    %v814 = vpow.pop %v813
    %v815 = vadd.f32 %v814, 1.0
    %v816 = vrcp.pop %v815
    %v817 = vmul.f32 1.0, %v816
    %v818 = vadd.f32 %v799, %v39
    %v819 = vmul.f32 %v810, %v818
    %v820 = vadd.f32 %v232, %v819
    %v821 = vtanh.pop %v820
    %v822 = vsub.f32 1.0, %v817
    %v823 = vmul.f32 %v822, %v821
    %v824 = vmul.f32 %v817, %v721
    %v825 = vadd.f32 %v823, %v824
    %v826 = vpack.c.bf16 %v825, %v825
    %827 = vmatprep.subr.bf16.mxu0 %v364
    %828 = vmatpush1.bf16.msra.mxu0 %v363
    %829 = vmatprep.subr.bf16.mxu0 %v367
    %830 = vmatpush1.bf16.msra.mxu0 %v366
    %831 = vmatprep.subr.bf16.mxu0 %v370
    %832 = vmatpush1.bf16.msra.mxu0 %v369
    %833 = vmatprep.subr.bf16.mxu0 %v373
    %834 = vmatpush1.bf16.msra.mxu0 %v372
    %835 = vmatprep.subr.bf16.mxu0 %v376
    %836 = vmatpush1.bf16.msra.mxu0 %v375
    %837 = vmatprep.subr.bf16.mxu0 %v379
    %838 = vmatpush1.bf16.msra.mxu0 %v378
    %839 = vmatprep.subr.bf16.mxu0 %v382
    %840 = vmatpush1.bf16.msra.mxu0 %v381
    %841 = vmatprep.subr.bf16.mxu0 %v385
    %842 = vmatpush1.bf16.msra.mxu0 %v384
    %843 = vmatprep.subr.bf16.mxu0 0
    %844 = vmatpush1.bf16.msra.mxu0 0
    %845 = vmatprep.subr.bf16.mxu0 0
    %846 = vmatpush1.bf16.msra.mxu0 0
    %847 = vmatprep.subr.bf16.mxu0 0
    %848 = vmatpush1.bf16.msra.mxu0 0
    %849 = vmatprep.subr.bf16.mxu0 0
    %850 = vmatpush1.bf16.msra.mxu0 0
    %851 = vmatprep.subr.bf16.mxu0 0
    %852 = vmatpush1.bf16.msra.mxu0 0
    %853 = vmatprep.subr.bf16.mxu0 0
    %854 = vmatpush1.bf16.msra.mxu0 0
    %855 = vmatprep.subr.bf16.mxu0 0
    %856 = vmatpush1.bf16.msra.mxu0 0
    %857 = vmatprep.subr.bf16.mxu0 0
    %858 = vmatpush1.bf16.msra.mxu0 0
    %859 = vmatprep.mubr.bf16.mxu0 0
    %860 = vmatmul.mubr.bf16.gmra.mrb[0].mxu0 %v826
    %v861 = vpop.f32.mrb[0].mxu0
    %v862 = vadd.f32 0.0, %v861
    %v863 = vpop.f32.mrb[0].mxu0
    %v864 = vadd.f32 0.0, %v863
    %v865 = vpop.f32.mrb[0].mxu0
    %v866 = vpop.f32.mrb[0].mxu0
    %867 = vdwg.mxu0
    %868 = vmatprep.subr.bf16.mxu0 0
    %869 = vmatpush1.bf16.msra.mxu0 %v365
    %870 = vmatprep.subr.bf16.mxu0 0
    %871 = vmatpush1.bf16.msra.mxu0 %v368
    %872 = vmatprep.subr.bf16.mxu0 0
    %873 = vmatpush1.bf16.msra.mxu0 %v371
    %874 = vmatprep.subr.bf16.mxu0 0
    %875 = vmatpush1.bf16.msra.mxu0 %v374
    %876 = vmatprep.subr.bf16.mxu0 0
    %877 = vmatpush1.bf16.msra.mxu0 %v377
    %878 = vmatprep.subr.bf16.mxu0 0
    %879 = vmatpush1.bf16.msra.mxu0 %v380
    %880 = vmatprep.subr.bf16.mxu0 0
    %881 = vmatpush1.bf16.msra.mxu0 %v383
    %882 = vmatprep.subr.bf16.mxu0 0
    %883 = vmatpush1.bf16.msra.mxu0 %v386
    %884 = vmatprep.subr.bf16.mxu0 0
    %885 = vmatpush1.bf16.msra.mxu0 0
    %886 = vmatprep.subr.bf16.mxu0 0
    %887 = vmatpush1.bf16.msra.mxu0 0
    %888 = vmatprep.subr.bf16.mxu0 0
    %889 = vmatpush1.bf16.msra.mxu0 0
    %890 = vmatprep.subr.bf16.mxu0 0
    %891 = vmatpush1.bf16.msra.mxu0 0
    %892 = vmatprep.subr.bf16.mxu0 0
    %893 = vmatpush1.bf16.msra.mxu0 0
    %894 = vmatprep.subr.bf16.mxu0 0
    %895 = vmatpush1.bf16.msra.mxu0 0
    %896 = vmatprep.subr.bf16.mxu0 0
    %897 = vmatpush1.bf16.msra.mxu0 0
    %898 = vmatprep.subr.bf16.mxu0 0
    %899 = vmatpush1.bf16.msra.mxu0 0
    %900 = vmatprep.mubr.bf16.mxu0 0
    %901 = vmatmul.mubr.bf16.gmra.mrb[0].mxu0 %v826
    %v902 = vpop.f32.mrb[0].mxu0
    %v903 = vadd.f32 0.0, %v902
    %v904 = vpop.f32.mrb[0].mxu0
    %v905 = vpop.f32.mrb[0].mxu0
    %v906 = vpop.f32.mrb[0].mxu0
    %907 = vdwg.mxu0
    %v908 = vadd.f32 %v168, %v862
    %v909 = vxor.u32 %v908, 2147483648
    %v910 = vmul.f32 %v909, 1.442695
    %v911 = vpow.pop %v910
    %v912 = vadd.f32 %v911, 1.0
    %v913 = vrcp.pop %v912
    %v914 = vmul.f32 1.0, %v913
    %v915 = vadd.f32 %v170, %v864
    %v916 = vxor.u32 %v915, 2147483648
    %v917 = vmul.f32 %v916, 1.442695
    %v918 = vpow.pop %v917
    %v919 = vadd.f32 %v918, 1.0
    %v920 = vrcp.pop %v919
    %v921 = vmul.f32 1.0, %v920
    %v922 = vadd.f32 %v903, %v39
    %v923 = vmul.f32 %v914, %v922
    %v924 = vadd.f32 %v237, %v923
    %v925 = vtanh.pop %v924
    %v926 = vsub.f32 1.0, %v921
    %v927 = vmul.f32 %v926, %v925
    %v928 = vmul.f32 %v921, %v825
    %v929 = vadd.f32 %v927, %v928
    %v930 = vpack.c.bf16 %v929, %v929
    %931 = vmatprep.subr.bf16.mxu0 %v364
    %932 = vmatpush1.bf16.msra.mxu0 %v363
    %933 = vmatprep.subr.bf16.mxu0 %v367
    %934 = vmatpush1.bf16.msra.mxu0 %v366
    %935 = vmatprep.subr.bf16.mxu0 %v370
    %936 = vmatpush1.bf16.msra.mxu0 %v369
    %937 = vmatprep.subr.bf16.mxu0 %v373
    %938 = vmatpush1.bf16.msra.mxu0 %v372
    %939 = vmatprep.subr.bf16.mxu0 %v376
    %940 = vmatpush1.bf16.msra.mxu0 %v375
    %941 = vmatprep.subr.bf16.mxu0 %v379
    %942 = vmatpush1.bf16.msra.mxu0 %v378
    %943 = vmatprep.subr.bf16.mxu0 %v382
    %944 = vmatpush1.bf16.msra.mxu0 %v381
    %945 = vmatprep.subr.bf16.mxu0 %v385
    %946 = vmatpush1.bf16.msra.mxu0 %v384
    %947 = vmatprep.subr.bf16.mxu0 0
    %948 = vmatpush1.bf16.msra.mxu0 0
    %949 = vmatprep.subr.bf16.mxu0 0
    %950 = vmatpush1.bf16.msra.mxu0 0
    %951 = vmatprep.subr.bf16.mxu0 0
    %952 = vmatpush1.bf16.msra.mxu0 0
    %953 = vmatprep.subr.bf16.mxu0 0
    %954 = vmatpush1.bf16.msra.mxu0 0
    %955 = vmatprep.subr.bf16.mxu0 0
    %956 = vmatpush1.bf16.msra.mxu0 0
    %957 = vmatprep.subr.bf16.mxu0 0
    %958 = vmatpush1.bf16.msra.mxu0 0
    %959 = vmatprep.subr.bf16.mxu0 0
    %960 = vmatpush1.bf16.msra.mxu0 0
    %961 = vmatprep.subr.bf16.mxu0 0
    %962 = vmatpush1.bf16.msra.mxu0 0
    %963 = vmatprep.mubr.bf16.mxu0 0
    %964 = vmatmul.mubr.bf16.gmra.mrb[0].mxu0 %v930
    %v965 = vpop.f32.mrb[0].mxu0
    %v966 = vadd.f32 0.0, %v965
    %v967 = vpop.f32.mrb[0].mxu0
    %v968 = vadd.f32 0.0, %v967
    %v969 = vpop.f32.mrb[0].mxu0
    %v970 = vpop.f32.mrb[0].mxu0
    %971 = vdwg.mxu0
    %972 = vmatprep.subr.bf16.mxu0 0
    %973 = vmatpush1.bf16.msra.mxu0 %v365
    %974 = vmatprep.subr.bf16.mxu0 0
    %975 = vmatpush1.bf16.msra.mxu0 %v368
    %976 = vmatprep.subr.bf16.mxu0 0
    %977 = vmatpush1.bf16.msra.mxu0 %v371
    %978 = vmatprep.subr.bf16.mxu0 0
    %979 = vmatpush1.bf16.msra.mxu0 %v374
    %980 = vmatprep.subr.bf16.mxu0 0
    %981 = vmatpush1.bf16.msra.mxu0 %v377
    %982 = vmatprep.subr.bf16.mxu0 0
    %983 = vmatpush1.bf16.msra.mxu0 %v380
    %984 = vmatprep.subr.bf16.mxu0 0
    %985 = vmatpush1.bf16.msra.mxu0 %v383
    %986 = vmatprep.subr.bf16.mxu0 0
    %987 = vmatpush1.bf16.msra.mxu0 %v386
    %988 = vmatprep.subr.bf16.mxu0 0
    %989 = vmatpush1.bf16.msra.mxu0 0
    %990 = vmatprep.subr.bf16.mxu0 0
    %991 = vmatpush1.bf16.msra.mxu0 0
    %992 = vmatprep.subr.bf16.mxu0 0
    %993 = vmatpush1.bf16.msra.mxu0 0
    %994 = vmatprep.subr.bf16.mxu0 0
    %995 = vmatpush1.bf16.msra.mxu0 0
    %996 = vmatprep.subr.bf16.mxu0 0
    %997 = vmatpush1.bf16.msra.mxu0 0
    %998 = vmatprep.subr.bf16.mxu0 0
    %999 = vmatpush1.bf16.msra.mxu0 0
    %1000 = vmatprep.subr.bf16.mxu0 0
    %1001 = vmatpush1.bf16.msra.mxu0 0
    %1002 = vmatprep.subr.bf16.mxu0 0
    %1003 = vmatpush1.bf16.msra.mxu0 0
    %1004 = vmatprep.mubr.bf16.mxu0 0
    %1005 = vmatmul.mubr.bf16.gmra.mrb[0].mxu0 %v930
    %v1006 = vpop.f32.mrb[0].mxu0
    %v1007 = vadd.f32 0.0, %v1006
    %v1008 = vpop.f32.mrb[0].mxu0
    %v1009 = vpop.f32.mrb[0].mxu0
    %v1010 = vpop.f32.mrb[0].mxu0
    %1011 = vdwg.mxu0
    %v1012 = vadd.f32 %v172, %v966
    %v1013 = vxor.u32 %v1012, 2147483648
    %v1014 = vmul.f32 %v1013, 1.442695
    %v1015 = vpow.pop %v1014
    %v1016 = vadd.f32 %v1015, 1.0
    %v1017 = vrcp.pop %v1016
    %v1018 = vmul.f32 1.0, %v1017
    %v1019 = vadd.f32 %v174, %v968
    %v1020 = vxor.u32 %v1019, 2147483648
    %v1021 = vmul.f32 %v1020, 1.442695
    %v1022 = vpow.pop %v1021
    %v1023 = vadd.f32 %v1022, 1.0
    %v1024 = vrcp.pop %v1023
    %v1025 = vmul.f32 1.0, %v1024
    %v1026 = vadd.f32 %v1007, %v39
    %v1027 = vmul.f32 %v1018, %v1026
    %v1028 = vadd.f32 %v240, %v1027
    %v1029 = vtanh.pop %v1028
    %v1030 = vsub.f32 1.0, %v1025
    %v1031 = vmul.f32 %v1030, %v1029
    %v1032 = vmul.f32 %v1025, %v929
    %v1033 = vadd.f32 %v1031, %v1032
    %v1034 = vpack.c.bf16 %v1033, %v1033
    %1035 = vmatprep.subr.bf16.mxu0 %v364
    %1036 = vmatpush1.bf16.msra.mxu0 %v363
    %1037 = vmatprep.subr.bf16.mxu0 %v367
    %1038 = vmatpush1.bf16.msra.mxu0 %v366
    %1039 = vmatprep.subr.bf16.mxu0 %v370
    %1040 = vmatpush1.bf16.msra.mxu0 %v369
    %1041 = vmatprep.subr.bf16.mxu0 %v373
    %1042 = vmatpush1.bf16.msra.mxu0 %v372
    %1043 = vmatprep.subr.bf16.mxu0 %v376
    %1044 = vmatpush1.bf16.msra.mxu0 %v375
    %1045 = vmatprep.subr.bf16.mxu0 %v379
    %1046 = vmatpush1.bf16.msra.mxu0 %v378
    %1047 = vmatprep.subr.bf16.mxu0 %v382
    %1048 = vmatpush1.bf16.msra.mxu0 %v381
    %1049 = vmatprep.subr.bf16.mxu0 %v385
    %1050 = vmatpush1.bf16.msra.mxu0 %v384
    %1051 = vmatprep.subr.bf16.mxu0 0
    %1052 = vmatpush1.bf16.msra.mxu0 0
    %1053 = vmatprep.subr.bf16.mxu0 0
    %1054 = vmatpush1.bf16.msra.mxu0 0
    %1055 = vmatprep.subr.bf16.mxu0 0
    %1056 = vmatpush1.bf16.msra.mxu0 0
    %1057 = vmatprep.subr.bf16.mxu0 0
    %1058 = vmatpush1.bf16.msra.mxu0 0
    %1059 = vmatprep.subr.bf16.mxu0 0
    %1060 = vmatpush1.bf16.msra.mxu0 0
    %1061 = vmatprep.subr.bf16.mxu0 0
    %1062 = vmatpush1.bf16.msra.mxu0 0
    %1063 = vmatprep.subr.bf16.mxu0 0
    %1064 = vmatpush1.bf16.msra.mxu0 0
    %1065 = vmatprep.subr.bf16.mxu0 0
    %1066 = vmatpush1.bf16.msra.mxu0 0
    %1067 = vmatprep.mubr.bf16.mxu0 0
    %1068 = vmatmul.mubr.bf16.gmra.mrb[0].mxu0 %v1034
    %v1069 = vpop.f32.mrb[0].mxu0
    %v1070 = vadd.f32 0.0, %v1069
    %v1071 = vpop.f32.mrb[0].mxu0
    %v1072 = vadd.f32 0.0, %v1071
    %v1073 = vpop.f32.mrb[0].mxu0
    %v1074 = vpop.f32.mrb[0].mxu0
    %1075 = vdwg.mxu0
    %1076 = vmatprep.subr.bf16.mxu0 0
    %1077 = vmatpush1.bf16.msra.mxu0 %v365
    %1078 = vmatprep.subr.bf16.mxu0 0
    %1079 = vmatpush1.bf16.msra.mxu0 %v368
    %1080 = vmatprep.subr.bf16.mxu0 0
    %1081 = vmatpush1.bf16.msra.mxu0 %v371
    %1082 = vmatprep.subr.bf16.mxu0 0
    %1083 = vmatpush1.bf16.msra.mxu0 %v374
    %1084 = vmatprep.subr.bf16.mxu0 0
    %1085 = vmatpush1.bf16.msra.mxu0 %v377
    %1086 = vmatprep.subr.bf16.mxu0 0
    %1087 = vmatpush1.bf16.msra.mxu0 %v380
    %1088 = vmatprep.subr.bf16.mxu0 0
    %1089 = vmatpush1.bf16.msra.mxu0 %v383
    %1090 = vmatprep.subr.bf16.mxu0 0
    %1091 = vmatpush1.bf16.msra.mxu0 %v386
    %1092 = vmatprep.subr.bf16.mxu0 0
    %1093 = vmatpush1.bf16.msra.mxu0 0
    %1094 = vmatprep.subr.bf16.mxu0 0
    %1095 = vmatpush1.bf16.msra.mxu0 0
    %1096 = vmatprep.subr.bf16.mxu0 0
    %1097 = vmatpush1.bf16.msra.mxu0 0
    %1098 = vmatprep.subr.bf16.mxu0 0
    %1099 = vmatpush1.bf16.msra.mxu0 0
    %1100 = vmatprep.subr.bf16.mxu0 0
    %1101 = vmatpush1.bf16.msra.mxu0 0
    %1102 = vmatprep.subr.bf16.mxu0 0
    %1103 = vmatpush1.bf16.msra.mxu0 0
    %1104 = vmatprep.subr.bf16.mxu0 0
    %1105 = vmatpush1.bf16.msra.mxu0 0
    %1106 = vmatprep.subr.bf16.mxu0 0
    %1107 = vmatpush1.bf16.msra.mxu0 0
    %1108 = vmatprep.mubr.bf16.mxu0 0
    %1109 = vmatmul.mubr.bf16.gmra.mrb[0].mxu0 %v1034
    %v1110 = vpop.f32.mrb[0].mxu0
    %v1111 = vadd.f32 0.0, %v1110
    %v1112 = vpop.f32.mrb[0].mxu0
    %v1113 = vpop.f32.mrb[0].mxu0
    %v1114 = vpop.f32.mrb[0].mxu0
    %1115 = vdwg.mxu0
    %v1116 = vadd.f32 %v178, %v1070
    %v1117 = vxor.u32 %v1116, 2147483648
    %v1118 = vmul.f32 %v1117, 1.442695
    %v1119 = vpow.pop %v1118
    %v1120 = vadd.f32 %v1119, 1.0
    %v1121 = vrcp.pop %v1120
    %v1122 = vmul.f32 1.0, %v1121
    %v1123 = vadd.f32 %v180, %v1072
    %v1124 = vxor.u32 %v1123, 2147483648
    %v1125 = vmul.f32 %v1124, 1.442695
    %v1126 = vpow.pop %v1125
    %v1127 = vadd.f32 %v1126, 1.0
    %v1128 = vrcp.pop %v1127
    %v1129 = vmul.f32 1.0, %v1128
    %v1130 = vadd.f32 %v1111, %v39
    %v1131 = vmul.f32 %v1122, %v1130
    %v1132 = vadd.f32 %v245, %v1131
    %v1133 = vtanh.pop %v1132
    %v1134 = vsub.f32 1.0, %v1129
    %v1135 = vmul.f32 %v1134, %v1133
    %v1136 = vmul.f32 %v1129, %v1033
    %v1137 = vadd.f32 %v1135, %v1136
    %v1138 = vpack.c.bf16 %v1137, %v1137
    %1139 = vmatprep.subr.bf16.mxu0 %v364
    %1140 = vmatpush1.bf16.msra.mxu0 %v363
    %1141 = vmatprep.subr.bf16.mxu0 %v367
    %1142 = vmatpush1.bf16.msra.mxu0 %v366
    %1143 = vmatprep.subr.bf16.mxu0 %v370
    %1144 = vmatpush1.bf16.msra.mxu0 %v369
    %1145 = vmatprep.subr.bf16.mxu0 %v373
    %1146 = vmatpush1.bf16.msra.mxu0 %v372
    %1147 = vmatprep.subr.bf16.mxu0 %v376
    %1148 = vmatpush1.bf16.msra.mxu0 %v375
    %1149 = vmatprep.subr.bf16.mxu0 %v379
    %1150 = vmatpush1.bf16.msra.mxu0 %v378
    %1151 = vmatprep.subr.bf16.mxu0 %v382
    %1152 = vmatpush1.bf16.msra.mxu0 %v381
    %1153 = vmatprep.subr.bf16.mxu0 %v385
    %1154 = vmatpush1.bf16.msra.mxu0 %v384
    %1155 = vmatprep.subr.bf16.mxu0 0
    %1156 = vmatpush1.bf16.msra.mxu0 0
    %1157 = vmatprep.subr.bf16.mxu0 0
    %1158 = vmatpush1.bf16.msra.mxu0 0
    %1159 = vmatprep.subr.bf16.mxu0 0
    %1160 = vmatpush1.bf16.msra.mxu0 0
    %1161 = vmatprep.subr.bf16.mxu0 0
    %1162 = vmatpush1.bf16.msra.mxu0 0
    %1163 = vmatprep.subr.bf16.mxu0 0
    %1164 = vmatpush1.bf16.msra.mxu0 0
    %1165 = vmatprep.subr.bf16.mxu0 0
    %1166 = vmatpush1.bf16.msra.mxu0 0
    %1167 = vmatprep.subr.bf16.mxu0 0
    %1168 = vmatpush1.bf16.msra.mxu0 0
    %1169 = vmatprep.subr.bf16.mxu0 0
    %1170 = vmatpush1.bf16.msra.mxu0 0
    %1171 = vmatprep.mubr.bf16.mxu0 0
    %1172 = vmatmul.mubr.bf16.gmra.mrb[0].mxu0 %v1138
    %v1173 = vpop.f32.mrb[0].mxu0
    %v1174 = vadd.f32 0.0, %v1173
    %v1175 = vpop.f32.mrb[0].mxu0
    %v1176 = vadd.f32 0.0, %v1175
    %v1177 = vpop.f32.mrb[0].mxu0
    %v1178 = vpop.f32.mrb[0].mxu0
    %1179 = vdwg.mxu0
    %1180 = vmatprep.subr.bf16.mxu0 0
    %1181 = vmatpush1.bf16.msra.mxu0 %v365
    %1182 = vmatprep.subr.bf16.mxu0 0
    %1183 = vmatpush1.bf16.msra.mxu0 %v368
    %1184 = vmatprep.subr.bf16.mxu0 0
    %1185 = vmatpush1.bf16.msra.mxu0 %v371
    %1186 = vmatprep.subr.bf16.mxu0 0
    %1187 = vmatpush1.bf16.msra.mxu0 %v374
    %1188 = vmatprep.subr.bf16.mxu0 0
    %1189 = vmatpush1.bf16.msra.mxu0 %v377
    %1190 = vmatprep.subr.bf16.mxu0 0
    %1191 = vmatpush1.bf16.msra.mxu0 %v380
    %1192 = vmatprep.subr.bf16.mxu0 0
    %1193 = vmatpush1.bf16.msra.mxu0 %v383
    %1194 = vmatprep.subr.bf16.mxu0 0
    %1195 = vmatpush1.bf16.msra.mxu0 %v386
    %1196 = vmatprep.subr.bf16.mxu0 0
    %1197 = vmatpush1.bf16.msra.mxu0 0
    %1198 = vmatprep.subr.bf16.mxu0 0
    %1199 = vmatpush1.bf16.msra.mxu0 0
    %1200 = vmatprep.subr.bf16.mxu0 0
    %1201 = vmatpush1.bf16.msra.mxu0 0
    %1202 = vmatprep.subr.bf16.mxu0 0
    %1203 = vmatpush1.bf16.msra.mxu0 0
    %1204 = vmatprep.subr.bf16.mxu0 0
    %1205 = vmatpush1.bf16.msra.mxu0 0
    %1206 = vmatprep.subr.bf16.mxu0 0
    %1207 = vmatpush1.bf16.msra.mxu0 0
    %1208 = vmatprep.subr.bf16.mxu0 0
    %1209 = vmatpush1.bf16.msra.mxu0 0
    %1210 = vmatprep.subr.bf16.mxu0 0
    %1211 = vmatpush1.bf16.msra.mxu0 0
    %1212 = vmatprep.mubr.bf16.mxu0 0
    %1213 = vmatmul.mubr.bf16.gmra.mrb[0].mxu0 %v1138
    %v1214 = vpop.f32.mrb[0].mxu0
    %v1215 = vadd.f32 0.0, %v1214
    %v1216 = vpop.f32.mrb[0].mxu0
    %v1217 = vpop.f32.mrb[0].mxu0
    %v1218 = vpop.f32.mrb[0].mxu0
    %1219 = vdwg.mxu0
    %v1220 = vadd.f32 %v182, %v1174
    %v1221 = vxor.u32 %v1220, 2147483648
    %v1222 = vmul.f32 %v1221, 1.442695
    %v1223 = vpow.pop %v1222
    %v1224 = vadd.f32 %v1223, 1.0
    %v1225 = vrcp.pop %v1224
    %v1226 = vmul.f32 1.0, %v1225
    %v1227 = vadd.f32 %v184, %v1176
    %v1228 = vxor.u32 %v1227, 2147483648
    %v1229 = vmul.f32 %v1228, 1.442695
    %v1230 = vpow.pop %v1229
    %v1231 = vadd.f32 %v1230, 1.0
    %v1232 = vrcp.pop %v1231
    %v1233 = vmul.f32 1.0, %v1232
    %v1234 = vadd.f32 %v1215, %v39
    %v1235 = vmul.f32 %v1226, %v1234
    %v1236 = vadd.f32 %v248, %v1235
    %v1237 = vtanh.pop %v1236
    %v1238 = vsub.f32 1.0, %v1233
    %v1239 = vmul.f32 %v1238, %v1237
    %v1240 = vmul.f32 %v1233, %v1137
    %v1241 = vadd.f32 %v1239, %v1240
    %v1242 = vpack.c.bf16 %v617, %v513
    %v1243 = vpack.c.bf16 %v825, %v721
    %v1244 = vpack.c.bf16 %v1033, %v929
    %v1245 = vpack.c.bf16 %v1241, %v1137
    %v1246 = vlaneseq
    %v1247 = vshrl.u32 %v1246, 7
    %v1248 = vsub.s32 2, %v1247
    %v1249 = vrot.slane %v33, %v1248
    %v1250 = vunpack.c.h.b16 %v252
    %v1251 = vunpack.c.h.b16 %v254
    %v1252 = vunpack.c.h.b16 %v256
    %v1253 = vunpack.c.h.b16 %v258
    %v1254 = vunpack.c.h.b16 %v260
    %v1255 = vunpack.c.h.b16 %v262
    %v1256 = vunpack.c.h.b16 %v264
    %v1257 = vunpack.c.h.b16 %v266
    %v1258 = vunpack.c.h.b16 %v268
    %v1259 = vunpack.c.h.b16 %v270
    %v1260 = vunpack.c.h.b16 %v272
    %v1261 = vunpack.c.h.b16 %v274
    %v1262 = vunpack.c.h.b16 %v276
    %v1263 = vunpack.c.h.b16 %v278
    %v1264 = vunpack.c.h.b16 %v280
    %v1265 = vunpack.c.h.b16 %v282
    %v1266 = vpack.c.b16 %v1251, %v1250
    %v1267 = vpack.c.b16 %v1253, %v1252
    %v1268 = vpack.c.b16 %v1255, %v1254
    %v1269 = vpack.c.b16 %v1257, %v1256
    %v1270 = vpack.c.b16 %v1259, %v1258
    %v1271 = vpack.c.b16 %v1261, %v1260
    %v1272 = vpack.c.b16 %v1263, %v1262
    %v1273 = vpack.c.b16 %v1265, %v1264
    %1282 = vmatprep.subr.bf16.mxu0 0
    %1283 = vmatpush1.bf16.msra.mxu0 %v1266
    %1284 = vmatprep.subr.bf16.mxu0 0
    %1285 = vmatpush1.bf16.msra.mxu0 %v1267
    %1286 = vmatprep.subr.bf16.mxu0 0
    %1287 = vmatpush1.bf16.msra.mxu0 %v1268
    %1288 = vmatprep.subr.bf16.mxu0 0
    %1289 = vmatpush1.bf16.msra.mxu0 %v1269
    %1290 = vmatprep.subr.bf16.mxu0 0
    %1291 = vmatpush1.bf16.msra.mxu0 %v1270
    %1292 = vmatprep.subr.bf16.mxu0 0
    %1293 = vmatpush1.bf16.msra.mxu0 %v1271
    %1294 = vmatprep.subr.bf16.mxu0 0
    %1295 = vmatpush1.bf16.msra.mxu0 %v1272
    %1296 = vmatprep.subr.bf16.mxu0 0
    %1297 = vmatpush1.bf16.msra.mxu0 %v1273
    %1298 = vmatprep.subr.bf16.mxu0 0
    %1299 = vmatpush1.bf16.msra.mxu0 0
    %1300 = vmatprep.subr.bf16.mxu0 0
    %1301 = vmatpush1.bf16.msra.mxu0 0
    %1302 = vmatprep.subr.bf16.mxu0 0
    %1303 = vmatpush1.bf16.msra.mxu0 0
    %1304 = vmatprep.subr.bf16.mxu0 0
    %1305 = vmatpush1.bf16.msra.mxu0 0
    %1306 = vmatprep.subr.bf16.mxu0 0
    %1307 = vmatpush1.bf16.msra.mxu0 0
    %1308 = vmatprep.subr.bf16.mxu0 0
    %1309 = vmatpush1.bf16.msra.mxu0 0
    %1310 = vmatprep.subr.bf16.mxu0 0
    %1311 = vmatpush1.bf16.msra.mxu0 0
    %1312 = vmatprep.subr.bf16.mxu0 0
    %1313 = vmatpush1.bf16.msra.mxu0 0
    %1314 = vmatprep.mubr.bf16.mxu0 0
    %1315 = vmatmul.mubr.bf16.gmra.mrb[0].mxu0 %v1242
    %v1316 = vpop.f32.mrb[0].mxu0
    %v1317 = vadd.f32 %v1249, %v1316
    %v1318 = vpop.f32.mrb[0].mxu0
    %v1319 = vpop.f32.mrb[0].mxu0
    %v1320 = vadd.f32 %v1249, %v1319
    %v1321 = vpop.f32.mrb[0].mxu0
    %1322 = vmatprep.mubr.bf16.mxu0 0
    %1323 = vmatmul.mubr.bf16.gmra.mrb[0].mxu0 %v1243
    %v1324 = vpop.f32.mrb[0].mxu0
    %v1325 = vadd.f32 %v1249, %v1324
    %v1326 = vpop.f32.mrb[0].mxu0
    %v1327 = vpop.f32.mrb[0].mxu0
    %v1328 = vadd.f32 %v1249, %v1327
    %v1329 = vpop.f32.mrb[0].mxu0
    %1330 = vmatprep.mubr.bf16.mxu0 0
    %1331 = vmatmul.mubr.bf16.gmra.mrb[0].mxu0 %v1244
    %v1332 = vpop.f32.mrb[0].mxu0
    %v1333 = vadd.f32 %v1249, %v1332
    %v1334 = vpop.f32.mrb[0].mxu0
    %v1335 = vpop.f32.mrb[0].mxu0
    %v1336 = vadd.f32 %v1249, %v1335
    %v1337 = vpop.f32.mrb[0].mxu0
    %1338 = vmatprep.mubr.bf16.mxu0 0
    %1339 = vmatmul.mubr.bf16.gmra.mrb[0].mxu0 %v1245
    %v1340 = vpop.f32.mrb[0].mxu0
    %v1341 = vadd.f32 %v1249, %v1340
    %v1342 = vpop.f32.mrb[0].mxu0
    %v1343 = vpop.f32.mrb[0].mxu0
    %v1344 = vadd.f32 %v1249, %v1343
    %v1345 = vpop.f32.mrb[0].mxu0
    %1346 = vdwg.mxu0
    %1347 = vst [vmem:[#allocation5] sm:$0xff] %v1317
    %1348 = vst [vmem:[#allocation5 + $0x8] sm:$0xff] %v1320
    %1349 = vst [vmem:[#allocation5 + $0x10] sm:$0xff] %v1325
    %1350 = vst [vmem:[#allocation5 + $0x18] sm:$0xff] %v1328
    %1351 = vst [vmem:[#allocation5 + $0x20] sm:$0xff] %v1333
    %1352 = vst [vmem:[#allocation5 + $0x28] sm:$0xff] %v1336
    %1353 = vst [vmem:[#allocation5 + $0x30] sm:$0xff] %v1341
    %1354 = vst [vmem:[#allocation5 + $0x38] sm:$0xff] %v1344
    // Predicated region
    $region22: #{tpu_custom_call.1} parent=1 // pred_check
      _
    $region23: #{tpu_custom_call.1} parent=1 // pred_check_branch
      %1356 = sbr.rel (0) target = $region25
    $region24: #{tpu_custom_call.1} parent=1 // pred_region
      %s1358 = ssub.s32 1024, 1024
      %1359 = vsyncadd [#allocation4], %s1358
      %s1360 = sshll.u32 [#allocation5], 4
      %s1361 = int_to_ptr.vmem [resolvable:$true] %s1360
      %1366 = dma.vmem_to_hbm [thread:$0]  %s1361, 1024, %s4, [#allocation4], 128, 128, 8
    $region25: #{tpu_custom_call.1} parent=1 // pred_fallthru
      _
    // Predicated region
    $region26: #{tpu_custom_call.1} parent=1 // pred_check
      _
    $region27: #{tpu_custom_call.1} parent=1 // pred_check_branch
      %1368 = sbr.rel (0) target = $region29
    $region28: #{tpu_custom_call.1} parent=1 // pred_region
      %1369 = dma.done [#allocation4], 1024
    $region29: #{tpu_custom_call.1} parent=1 // pred_fallthru
      _
    %1370 = vsyncpa [#allocation3], 1
    %1371 = vsyncpa [#allocation4], 1

</llo_original>
